<compile_context>
chip_gen: v7x
topology: tpu7x:2x2x1
jax: 0.10.0
libtpu: 0.0.40
codegen_flags: <defaults>
</compile_context>

<pallas_src>
import jax
import jax.numpy as jnp
from jax.experimental import pallas as pl
from jax.experimental.pallas import tpu as pltpu


_VMEM = pl.BlockSpec(memory_space=pltpu.MemorySpace.VMEM)


# ----------------------------- fused Pallas kernel ----------------------------- #

def make_greedy_decode_kernel(T, H, V, L, max_length, sos_token):
    """Encoder (2-layer bidirectional GRU) + greedy attention decode, fully fused.

    Inputs (all VMEM, f32 unless noted):
      x_ref    : (T, H)       embedded encoder input sequence
      w0ih_ref : (2, H, 3H)   encoder layer-0 input weights per direction (gates r,z,n)
      w0hh_ref : (2, H, 3H)   encoder layer-0 hidden weights
      b0ih_ref : (2, 1, 3H)   encoder layer-0 input biases
      b0hh_ref : (2, 1, 3H)   encoder layer-0 hidden biases
      w1ih_ref : (2, 2H, 3H)  encoder layer-1 input weights (input = concat fwd|bwd)
      w1hh_ref : (2, H, 3H)
      b1ih_ref : (2, 1, 3H)
      b1hh_ref : (2, 1, 3H)
      emb_ref  : (V, H)       embedding table (decoder token feedback = one-hot matmul)
      dwih_ref : (L, H, 3H)   decoder GRU input weights
      dwhh_ref : (L, H, 3H)   decoder GRU hidden weights
      dbih_ref : (L, 1, 3H)
      dbhh_ref : (L, 1, 3H)
      wc_ref   : (2, H, H)    concat Linear, split [rnn-part, context-part], transposed
      bc_ref   : (1, H)
      wo_ref   : (H, V)       output Linear, transposed
      bo_ref   : (1, V)
    Outputs:
      tok_ref   : (1, max_length) int32
      score_ref : (1, max_length) float32
    Scratch:
      gif_scr, gib_scr : (T, 3H)  per-direction input projections (reused across layers)
      l0f_scr, l0b_scr : (T, H)   layer-0 outputs (forward time order)
      e1f_scr, e1b_scr : (T, H)   layer-1 outputs (forward time order)
    """

    def gru_gates(gi, gh, h):
        r = jax.nn.sigmoid(gi[:, 0:H] + gh[:, 0:H])
        z = jax.nn.sigmoid(gi[:, H:2 * H] + gh[:, H:2 * H])
        n = jnp.tanh(gi[:, 2 * H:3 * H] + r * gh[:, 2 * H:3 * H])
        return (1.0 - z) * n + z * h

    def kernel(x_ref,
               w0ih_ref, w0hh_ref, b0ih_ref, b0hh_ref,
               w1ih_ref, w1hh_ref, b1ih_ref, b1hh_ref,
               emb_ref, dwih_ref, dwhh_ref, dbih_ref, dbhh_ref,
               wc_ref, bc_ref, wo_ref, bo_ref,
               tok_ref, score_ref,
               gif_scr, gib_scr, l0f_scr, l0b_scr, e1f_scr, e1b_scr):

        def enc_cell(gi_t, h, whh, bhh):
            gh = jnp.dot(h, whh, preferred_element_type=jnp.float32) + bhh
            return gru_gates(gi_t, gh, h)

        h0 = jnp.zeros((1, H), jnp.float32)

        # ------------------- encoder layer 0 (bidirectional) -------------------- #
        x = x_ref[...]
        gif_scr[...] = (jnp.dot(x, w0ih_ref[0], preferred_element_type=jnp.float32)
                        + b0ih_ref[0])
        gib_scr[...] = (jnp.dot(x, w0ih_ref[1], preferred_element_type=jnp.float32)
                        + b0ih_ref[1])

        def l0_step(t, carry):
            hf, hb = carry
            hf = enc_cell(gif_scr[pl.ds(t, 1), :], hf, w0hh_ref[0], b0hh_ref[0])
            hb = enc_cell(gib_scr[pl.ds(T - 1 - t, 1), :], hb, w0hh_ref[1], b0hh_ref[1])
            l0f_scr[pl.ds(t, 1), :] = hf
            l0b_scr[pl.ds(T - 1 - t, 1), :] = hb
            return hf, hb

        hf0, hb0 = jax.lax.fori_loop(0, T, l0_step, (h0, h0))

        # ------------------- encoder layer 1 (input = concat fwd|bwd) ----------- #
        # concat is never materialised: split the (2H, 3H) input weight instead.
        l0f = l0f_scr[...]
        l0b = l0b_scr[...]
        w1f = w1ih_ref[0]
        w1b = w1ih_ref[1]
        gif_scr[...] = (jnp.dot(l0f, w1f[0:H, :], preferred_element_type=jnp.float32)
                        + jnp.dot(l0b, w1f[H:2 * H, :], preferred_element_type=jnp.float32)
                        + b1ih_ref[0])
        gib_scr[...] = (jnp.dot(l0f, w1b[0:H, :], preferred_element_type=jnp.float32)
                        + jnp.dot(l0b, w1b[H:2 * H, :], preferred_element_type=jnp.float32)
                        + b1ih_ref[1])

        def l1_step(t, carry):
            hf, hb = carry
            hf = enc_cell(gif_scr[pl.ds(t, 1), :], hf, w1hh_ref[0], b1hh_ref[0])
            hb = enc_cell(gib_scr[pl.ds(T - 1 - t, 1), :], hb, w1hh_ref[1], b1hh_ref[1])
            e1f_scr[pl.ds(t, 1), :] = hf
            e1b_scr[pl.ds(T - 1 - t, 1), :] = hb
            return hf, hb

        hf1, hb1 = jax.lax.fori_loop(0, T, l1_step, (h0, h0))

        # encoder_outputs = outputs[:, :, :H] + outputs[:, :, H:]
        enc = e1f_scr[...] + e1b_scr[...]                                     # (T, H)

        # decoder_hidden = encoder_hidden[:L]
        # (PyTorch GRU hidden layout: [l0_fwd, l0_bwd, l1_fwd, l1_bwd]; the tutorial's
        #  slice therefore picks layer-0 fwd & bwd final states — kept intentionally.)
        enc_hidden = [hf0, hb0, hf1, hb1]
        hs_init = tuple(enc_hidden[:L])

        # ------------------- greedy decode loop (Luong 'dot' attention) --------- #
        vocab_iota = jax.lax.broadcasted_iota(jnp.int32, (1, V), 1)
        step_iota = jax.lax.broadcasted_iota(jnp.int32, (1, max_length), 1)

        def dec_body(step, carry):
            tok_prev, hs, tok_vec, score_vec = carry

            # embedding lookup of the previous token via one-hot matmul (stays in VMEM)
            onehot = (vocab_iota == tok_prev).astype(jnp.float32)            # (1, V)
            x = jnp.dot(onehot, emb_ref[...],
                        preferred_element_type=jnp.float32)                  # (1, H)

            new_hs = []
            for l in range(L):
                gi = (jnp.dot(x, dwih_ref[l], preferred_element_type=jnp.float32)
                      + dbih_ref[l])
                gh = (jnp.dot(hs[l], dwhh_ref[l], preferred_element_type=jnp.float32)
                      + dbhh_ref[l])
                h = gru_gates(gi, gh, hs[l])
                new_hs.append(h)
                x = h
            rnn = x                                                          # (1, H)

            # Luong 'dot' attention: contract both operands on their last (lane) dim,
            # so no explicit transpose of the encoder outputs is needed.
            energies = jnp.einsum('qh,th->qt', rnn, enc,
                                  preferred_element_type=jnp.float32)        # (1, T)
            attn = jax.nn.softmax(energies, axis=-1)
            context = jnp.dot(attn, enc,
                              preferred_element_type=jnp.float32)            # (1, H)

            concat_out = jnp.tanh(
                jnp.dot(rnn, wc_ref[0], preferred_element_type=jnp.float32)
                + jnp.dot(context, wc_ref[1], preferred_element_type=jnp.float32)
                + bc_ref[...])                                               # (1, H)

            logits = (jnp.dot(concat_out, wo_ref[...],
                              preferred_element_type=jnp.float32)
                      + bo_ref[...])                                         # (1, V)

            # argmax(softmax(logits)) == argmax(logits); max prob = 1 / sum(exp(l - m))
            m = jnp.max(logits, axis=-1, keepdims=True)                      # (1, 1)
            denom = jnp.sum(jnp.exp(logits - m), axis=-1, keepdims=True)     # (1, 1)
            score = pl.reciprocal(denom, approx=True)                        # (1, 1)
            tok = jnp.min(jnp.where(logits >= m, vocab_iota, V),
                          axis=-1, keepdims=True).astype(jnp.int32)          # first argmax

            sel = step_iota == step
            tok_vec = jnp.where(sel, tok, tok_vec)
            score_vec = jnp.where(sel, score, score_vec)
            return tok, tuple(new_hs), tok_vec, score_vec

        carry0 = (jnp.full((1, 1), sos_token, jnp.int32),
                  hs_init,
                  jnp.zeros((1, max_length), jnp.int32),
                  jnp.zeros((1, max_length), jnp.float32))
        _, _, tok_vec, score_vec = jax.lax.fori_loop(0, max_length, dec_body, carry0)

        tok_ref[...] = tok_vec
        score_ref[...] = score_vec

    return kernel


# ------------------------------ wrapper ------------------------------------- #

def _greedy_search_decode(input_seq, input_length, params, *,
                          max_length, hidden_size, decoder_n_layers, sos_token):
    """GreedySearchDecoder.forward (batch = 1)."""
    # TODO(synk): pack_padded_sequence variable-length masking not implemented;
    #             assumes input_length == seq_len (no padding). Dropout is identity (eval).
    del input_length
    H = hidden_size
    L = decoder_n_layers
    V = params['embedding'].shape[0]
    assert L <= 4, "decoder_n_layers must be <= 2 * encoder layers"

    emb = params['embedding'][input_seq[:, 0]]     # (T, H) encoder input embedding
    T = emb.shape[0]

    enc0 = params['enc_gru'][0]
    enc1 = params['enc_gru'][1]

    kernel = make_greedy_decode_kernel(T, H, V, L, max_length, sos_token)
    tokens, scores = pl.pallas_call(
        kernel,
        out_shape=(jax.ShapeDtypeStruct((1, max_length), jnp.int32),
                   jax.ShapeDtypeStruct((1, max_length), jnp.float32)),
        in_specs=[_VMEM] * 18,
        out_specs=(_VMEM, _VMEM),
        scratch_shapes=[pltpu.VMEM((T, 3 * H), jnp.float32),
                        pltpu.VMEM((T, 3 * H), jnp.float32),
                        pltpu.VMEM((T, H), jnp.float32),
                        pltpu.VMEM((T, H), jnp.float32),
                        pltpu.VMEM((T, H), jnp.float32),
                        pltpu.VMEM((T, H), jnp.float32)],
    )(emb,
      enc0['wih_t'], enc0['whh_t'], enc0['bih'], enc0['bhh'],
      enc1['wih_t'], enc1['whh_t'], enc1['bih'], enc1['bhh'],
      params['embedding'],
      params['dec_wih'], params['dec_whh'], params['dec_bih'], params['dec_bhh'],
      params['wc_t'], params['bc'], params['wo_t'], params['bo'])

    return tokens[0], scores[0]


greedy_search_decode = jax.jit(
    _greedy_search_decode,
    static_argnames=('max_length', 'hidden_size', 'decoder_n_layers', 'sos_token'))


# ------------------------------ parameter init ------------------------------ #

def init_params(key, hidden_size, vocab_size, n_layers=2):
    keys = iter(jax.random.split(key, 64))

    def u(shape, scale=0.1):
        return jax.random.uniform(next(keys), shape, jnp.float32, -scale, scale)

    H, V = hidden_size, vocab_size
    params = {
        'embedding': u((V, H), 0.5),    # shared encoder/decoder embedding
        'enc_gru': {},
        'wc_t': u((2, H, H)),           # concat Linear(2H -> H), split + transposed
        'bc': u((1, H)),
        'wo_t': u((H, V)),              # out Linear(H -> V), transposed
        'bo': u((1, V)),
    }
    for layer in range(n_layers):
        I = H if layer == 0 else 2 * H
        params['enc_gru'][layer] = {
            # gates stacked along lanes in PyTorch order (r, z, n); leading axis = direction
            'wih_t': u((2, I, 3 * H)),
            'whh_t': u((2, H, 3 * H)),
            'bih': u((2, 1, 3 * H)),
            'bhh': u((2, 1, 3 * H)),
        }
    # decoder GRU: leading axis = layer, gates stacked along lanes (r, z, n)
    params['dec_wih'] = u((n_layers, H, 3 * H))
    params['dec_whh'] = u((n_layers, H, 3 * H))
    params['dec_bih'] = u((n_layers, 1, 3 * H))
    params['dec_bhh'] = u((n_layers, 1, 3 * H))
    return params


# ----------------------------------- main ----------------------------------- #

if __name__ == "__main__":
    H = 32            # hidden size
    V = 64            # vocab / output size
    T = 8             # input sequence length
    MAX_LENGTH = 6
    SOS_TOKEN = 1
    DECODER_N_LAYERS = 2

    root = jax.random.PRNGKey(0)
    k_params, k_seq = jax.random.split(root)

    params = init_params(k_params, H, V, n_layers=2)

    input_seq = jax.random.randint(k_seq, (T, 1), 0, V).astype(jnp.int32)  # (T, B=1)
    input_length = jnp.array([T], dtype=jnp.int32)

    all_tokens, all_scores = greedy_search_decode(
        input_seq, input_length, params,
        max_length=MAX_LENGTH, hidden_size=H,
        decoder_n_layers=DECODER_N_LAYERS, sos_token=SOS_TOKEN)

    jax.block_until_ready((all_tokens, all_scores))
    assert all_tokens.shape == (MAX_LENGTH,)
    assert all_scores.shape == (MAX_LENGTH,)
    assert bool(jnp.all(all_tokens >= 0)) and bool(jnp.all(all_tokens < V))
    assert bool(jnp.all(all_scores > 0.0)) and bool(jnp.all(all_scores <= 1.0 + 1e-3))
    print("KERNEL_OK")
</pallas_src>

<mosaic_0001>
module attributes {stable_mosaic.version = 11 : i64} {
  func.func @kernel(%arg0: memref<8x32xf32, #tpu.memory_space<vmem>>, %arg1: memref<2x32x96xf32, #tpu.memory_space<vmem>>, %arg2: memref<2x32x96xf32, #tpu.memory_space<vmem>>, %arg3: memref<2x1x96xf32, #tpu.memory_space<vmem>>, %arg4: memref<2x1x96xf32, #tpu.memory_space<vmem>>, %arg5: memref<2x64x96xf32, #tpu.memory_space<vmem>>, %arg6: memref<2x32x96xf32, #tpu.memory_space<vmem>>, %arg7: memref<2x1x96xf32, #tpu.memory_space<vmem>>, %arg8: memref<2x1x96xf32, #tpu.memory_space<vmem>>, %arg9: memref<64x32xf32, #tpu.memory_space<vmem>>, %arg10: memref<2x32x96xf32, #tpu.memory_space<vmem>>, %arg11: memref<2x32x96xf32, #tpu.memory_space<vmem>>, %arg12: memref<2x1x96xf32, #tpu.memory_space<vmem>>, %arg13: memref<2x1x96xf32, #tpu.memory_space<vmem>>, %arg14: memref<2x32x32xf32, #tpu.memory_space<vmem>>, %arg15: memref<1x32xf32, #tpu.memory_space<vmem>>, %arg16: memref<32x64xf32, #tpu.memory_space<vmem>>, %arg17: memref<1x64xf32, #tpu.memory_space<vmem>>, %arg18: memref<1x6xi32, #tpu.memory_space<vmem>>, %arg19: memref<1x6xf32, #tpu.memory_space<vmem>>, %arg20: memref<8x96xf32, #tpu.memory_space<vmem>>, %arg21: memref<8x96xf32, #tpu.memory_space<vmem>>, %arg22: memref<8x32xf32, #tpu.memory_space<vmem>>, %arg23: memref<8x32xf32, #tpu.memory_space<vmem>>, %arg24: memref<8x32xf32, #tpu.memory_space<vmem>>, %arg25: memref<8x32xf32, #tpu.memory_space<vmem>>) attributes {dimension_semantics = [], scalar_prefetch = 0 : i64, scratch_operands = 6 : i64, tpu.core_type = #tpu.core_type<tc>} {
    %cst = arith.constant 0.000000e+00 : f32
    %0 = vector.broadcast %cst : f32 to vector<1x32xf32>
    %c0 = arith.constant 0 : index
    %c0_0 = arith.constant 0 : index
    %1 = vector.load %arg0[%c0, %c0_0] : memref<8x32xf32, #tpu.memory_space<vmem>>, vector<8x32xf32>
    %c0_1 = arith.constant 0 : index
    %c0_2 = arith.constant 0 : index
    %c0_3 = arith.constant 0 : index
    %2 = vector.load %arg1[%c0_1, %c0_2, %c0_3] : memref<2x32x96xf32, #tpu.memory_space<vmem>>, vector<1x32x96xf32>
    %3 = vector.shape_cast %2 : vector<1x32x96xf32> to vector<32x96xf32>
    %cst_4 = arith.constant dense<0.000000e+00> : vector<8x96xf32>
    %4 = tpu.matmul %1, %3, %cst_4 {dimension_numbers = #tpu.dot_dimension_numbers<[1], [0], [0], [1], [0, 0, 1, 1], [], []>} : vector<8x32xf32>, vector<32x96xf32>, vector<8x96xf32> -> vector<8x96xf32>
    %c0_5 = arith.constant 0 : index
    %c0_6 = arith.constant 0 : index
    %c0_7 = arith.constant 0 : index
    %5 = vector.load %arg3[%c0_5, %c0_6, %c0_7] : memref<2x1x96xf32, #tpu.memory_space<vmem>>, vector<1x1x96xf32>
    %6 = vector.shape_cast %5 : vector<1x1x96xf32> to vector<1x96xf32>
    %7 = vector.broadcast %6 : vector<1x96xf32> to vector<8x96xf32>
    %8 = arith.addf %4, %7 : vector<8x96xf32>
    %c0_8 = arith.constant 0 : index
    %c0_9 = arith.constant 0 : index
    %9 = vector.load %arg20[%c0_8, %c0_9] : memref<8x96xf32, #tpu.memory_space<vmem>>, vector<8x96xf32>
    tpu.vector_store %arg20[%c0_8, %c0_9], %8 {strides = array<i32>} : memref<8x96xf32, #tpu.memory_space<vmem>>, vector<8x96xf32>,
    %c1 = arith.constant 1 : index
    %c0_10 = arith.constant 0 : index
    %c0_11 = arith.constant 0 : index
    %10 = vector.load %arg1[%c1, %c0_10, %c0_11] : memref<2x32x96xf32, #tpu.memory_space<vmem>>, vector<1x32x96xf32>
    %11 = vector.shape_cast %10 : vector<1x32x96xf32> to vector<32x96xf32>
    %cst_12 = arith.constant dense<0.000000e+00> : vector<8x96xf32>
    %12 = tpu.matmul %1, %11, %cst_12 {dimension_numbers = #tpu.dot_dimension_numbers<[1], [0], [0], [1], [0, 0, 1, 1], [], []>} : vector<8x32xf32>, vector<32x96xf32>, vector<8x96xf32> -> vector<8x96xf32>
    %c1_13 = arith.constant 1 : index
    %c0_14 = arith.constant 0 : index
    %c0_15 = arith.constant 0 : index
    %13 = vector.load %arg3[%c1_13, %c0_14, %c0_15] : memref<2x1x96xf32, #tpu.memory_space<vmem>>, vector<1x1x96xf32>
    %14 = vector.shape_cast %13 : vector<1x1x96xf32> to vector<1x96xf32>
    %15 = vector.broadcast %14 : vector<1x96xf32> to vector<8x96xf32>
    %16 = arith.addf %12, %15 : vector<8x96xf32>
    %c0_16 = arith.constant 0 : index
    %c0_17 = arith.constant 0 : index
    %17 = vector.load %arg21[%c0_16, %c0_17] : memref<8x96xf32, #tpu.memory_space<vmem>>, vector<8x96xf32>
    tpu.vector_store %arg21[%c0_16, %c0_17], %16 {strides = array<i32>} : memref<8x96xf32, #tpu.memory_space<vmem>>, vector<8x96xf32>,
    %c0_i32 = arith.constant 0 : i32
    %c8_i32 = arith.constant 8 : i32
    %18 = arith.addi %c0_i32, %c8_i32 : i32
    %c1_i32 = arith.constant 1 : i32
    %19:2 = scf.for %arg26 = %c0_i32 to %18 step %c1_i32 iter_args(%arg27 = %0, %arg28 = %0) -> (vector<1x32xf32>, vector<1x32xf32>)  : i32 {
      %60 = arith.index_cast %arg26 : i32 to index
      %c0_61 = arith.constant 0 : index
      %61 = vector.load %arg20[%60, %c0_61] : memref<8x96xf32, #tpu.memory_space<vmem>>, vector<1x96xf32>
      %c0_62 = arith.constant 0 : index
      %c0_63 = arith.constant 0 : index
      %c0_64 = arith.constant 0 : index
      %62 = vector.load %arg2[%c0_62, %c0_63, %c0_64] : memref<2x32x96xf32, #tpu.memory_space<vmem>>, vector<1x32x96xf32>
      %63 = vector.shape_cast %62 : vector<1x32x96xf32> to vector<32x96xf32>
      %c0_65 = arith.constant 0 : index
      %c0_66 = arith.constant 0 : index
      %c0_67 = arith.constant 0 : index
      %64 = vector.load %arg4[%c0_65, %c0_66, %c0_67] : memref<2x1x96xf32, #tpu.memory_space<vmem>>, vector<1x1x96xf32>
      %65 = vector.shape_cast %64 : vector<1x1x96xf32> to vector<1x96xf32>
      %cst_68 = arith.constant dense<0.000000e+00> : vector<1x96xf32>
      %66 = tpu.matmul %arg27, %63, %cst_68 {dimension_numbers = #tpu.dot_dimension_numbers<[1], [0], [0], [1], [0, 0, 1, 1], [], []>} : vector<1x32xf32>, vector<32x96xf32>, vector<1x96xf32> -> vector<1x96xf32>
      %67 = arith.addf %66, %65 : vector<1x96xf32>
      %68 = vector.extract_strided_slice %61 {offsets = [0, 0], sizes = [1, 32], strides = [1, 1]} : vector<1x96xf32> to vector<1x32xf32>
      %69 = vector.extract_strided_slice %67 {offsets = [0, 0], sizes = [1, 32], strides = [1, 1]} : vector<1x96xf32> to vector<1x32xf32>
      %70 = arith.addf %68, %69 : vector<1x32xf32>
      %71 = arith.negf %70 : vector<1x32xf32>
      %72 = math.exp %71 : vector<1x32xf32>
      %cst_69 = arith.constant 1.000000e+00 : f32
      %73 = vector.broadcast %cst_69 : f32 to vector<1x32xf32>
      %74 = arith.addf %73, %72 : vector<1x32xf32>
      %75 = arith.divf %73, %74 : vector<1x32xf32>
      %76 = vector.extract_strided_slice %61 {offsets = [0, 32], sizes = [1, 32], strides = [1, 1]} : vector<1x96xf32> to vector<1x32xf32>
      %77 = vector.extract_strided_slice %67 {offsets = [0, 32], sizes = [1, 32], strides = [1, 1]} : vector<1x96xf32> to vector<1x32xf32>
      %78 = arith.addf %76, %77 : vector<1x32xf32>
      %79 = arith.negf %78 : vector<1x32xf32>
      %80 = math.exp %79 : vector<1x32xf32>
      %cst_70 = arith.constant 1.000000e+00 : f32
      %81 = vector.broadcast %cst_70 : f32 to vector<1x32xf32>
      %82 = arith.addf %81, %80 : vector<1x32xf32>
      %83 = arith.divf %81, %82 : vector<1x32xf32>
      %84 = vector.extract_strided_slice %61 {offsets = [0, 64], sizes = [1, 32], strides = [1, 1]} : vector<1x96xf32> to vector<1x32xf32>
      %85 = vector.extract_strided_slice %67 {offsets = [0, 64], sizes = [1, 32], strides = [1, 1]} : vector<1x96xf32> to vector<1x32xf32>
      %86 = arith.mulf %75, %85 : vector<1x32xf32>
      %87 = arith.addf %84, %86 : vector<1x32xf32>
      %88 = math.tanh %87 : vector<1x32xf32>
      %cst_71 = arith.constant 1.000000e+00 : f32
      %89 = vector.broadcast %cst_71 : f32 to vector<1x32xf32>
      %90 = arith.subf %89, %83 : vector<1x32xf32>
      %91 = arith.mulf %90, %88 : vector<1x32xf32>
      %92 = arith.mulf %83, %arg27 : vector<1x32xf32>
      %93 = arith.addf %91, %92 : vector<1x32xf32>
      %c7_i32 = arith.constant 7 : i32
      %94 = arith.subi %c7_i32, %arg26 : i32
      %95 = arith.index_cast %94 : i32 to index
      %c0_72 = arith.constant 0 : index
      %96 = vector.load %arg21[%95, %c0_72] : memref<8x96xf32, #tpu.memory_space<vmem>>, vector<1x96xf32>
      %c1_73 = arith.constant 1 : index
      %c0_74 = arith.constant 0 : index
      %c0_75 = arith.constant 0 : index
      %97 = vector.load %arg2[%c1_73, %c0_74, %c0_75] : memref<2x32x96xf32, #tpu.memory_space<vmem>>, vector<1x32x96xf32>
      %98 = vector.shape_cast %97 : vector<1x32x96xf32> to vector<32x96xf32>
      %c1_76 = arith.constant 1 : index
      %c0_77 = arith.constant 0 : index
      %c0_78 = arith.constant 0 : index
      %99 = vector.load %arg4[%c1_76, %c0_77, %c0_78] : memref<2x1x96xf32, #tpu.memory_space<vmem>>, vector<1x1x96xf32>
      %100 = vector.shape_cast %99 : vector<1x1x96xf32> to vector<1x96xf32>
      %cst_79 = arith.constant dense<0.000000e+00> : vector<1x96xf32>
      %101 = tpu.matmul %arg28, %98, %cst_79 {dimension_numbers = #tpu.dot_dimension_numbers<[1], [0], [0], [1], [0, 0, 1, 1], [], []>} : vector<1x32xf32>, vector<32x96xf32>, vector<1x96xf32> -> vector<1x96xf32>
      %102 = arith.addf %101, %100 : vector<1x96xf32>
      %103 = vector.extract_strided_slice %96 {offsets = [0, 0], sizes = [1, 32], strides = [1, 1]} : vector<1x96xf32> to vector<1x32xf32>
      %104 = vector.extract_strided_slice %102 {offsets = [0, 0], sizes = [1, 32], strides = [1, 1]} : vector<1x96xf32> to vector<1x32xf32>
      %105 = arith.addf %103, %104 : vector<1x32xf32>
      %106 = arith.negf %105 : vector<1x32xf32>
      %107 = math.exp %106 : vector<1x32xf32>
      %cst_80 = arith.constant 1.000000e+00 : f32
      %108 = vector.broadcast %cst_80 : f32 to vector<1x32xf32>
      %109 = arith.addf %108, %107 : vector<1x32xf32>
      %110 = arith.divf %108, %109 : vector<1x32xf32>
      %111 = vector.extract_strided_slice %96 {offsets = [0, 32], sizes = [1, 32], strides = [1, 1]} : vector<1x96xf32> to vector<1x32xf32>
      %112 = vector.extract_strided_slice %102 {offsets = [0, 32], sizes = [1, 32], strides = [1, 1]} : vector<1x96xf32> to vector<1x32xf32>
      %113 = arith.addf %111, %112 : vector<1x32xf32>
      %114 = arith.negf %113 : vector<1x32xf32>
      %115 = math.exp %114 : vector<1x32xf32>
      %cst_81 = arith.constant 1.000000e+00 : f32
      %116 = vector.broadcast %cst_81 : f32 to vector<1x32xf32>
      %117 = arith.addf %116, %115 : vector<1x32xf32>
      %118 = arith.divf %116, %117 : vector<1x32xf32>
      %119 = vector.extract_strided_slice %96 {offsets = [0, 64], sizes = [1, 32], strides = [1, 1]} : vector<1x96xf32> to vector<1x32xf32>
      %120 = vector.extract_strided_slice %102 {offsets = [0, 64], sizes = [1, 32], strides = [1, 1]} : vector<1x96xf32> to vector<1x32xf32>
      %121 = arith.mulf %110, %120 : vector<1x32xf32>
      %122 = arith.addf %119, %121 : vector<1x32xf32>
      %123 = math.tanh %122 : vector<1x32xf32>
      %cst_82 = arith.constant 1.000000e+00 : f32
      %124 = vector.broadcast %cst_82 : f32 to vector<1x32xf32>
      %125 = arith.subf %124, %118 : vector<1x32xf32>
      %126 = arith.mulf %125, %123 : vector<1x32xf32>
      %127 = arith.mulf %118, %arg28 : vector<1x32xf32>
      %128 = arith.addf %126, %127 : vector<1x32xf32>
      %129 = arith.index_cast %arg26 : i32 to index
      %c0_83 = arith.constant 0 : index
      %130 = vector.load %arg22[%129, %c0_83] : memref<8x32xf32, #tpu.memory_space<vmem>>, vector<1x32xf32>
      tpu.vector_store %arg22[%129, %c0_83], %93 {strides = array<i32>} : memref<8x32xf32, #tpu.memory_space<vmem>>, vector<1x32xf32>,
      %c7_i32_84 = arith.constant 7 : i32
      %131 = arith.subi %c7_i32_84, %arg26 : i32
      %132 = arith.index_cast %131 : i32 to index
      %c0_85 = arith.constant 0 : index
      %133 = vector.load %arg23[%132, %c0_85] : memref<8x32xf32, #tpu.memory_space<vmem>>, vector<1x32xf32>
      tpu.vector_store %arg23[%132, %c0_85], %128 {strides = array<i32>} : memref<8x32xf32, #tpu.memory_space<vmem>>, vector<1x32xf32>,
      scf.yield %93, %128 : vector<1x32xf32>, vector<1x32xf32>
    }
    %c8_i32_18 = arith.constant 8 : i32
    %c0_19 = arith.constant 0 : index
    %c0_20 = arith.constant 0 : index
    %20 = vector.load %arg22[%c0_19, %c0_20] : memref<8x32xf32, #tpu.memory_space<vmem>>, vector<8x32xf32>
    %c0_21 = arith.constant 0 : index
    %c0_22 = arith.constant 0 : index
    %21 = vector.load %arg23[%c0_21, %c0_22] : memref<8x32xf32, #tpu.memory_space<vmem>>, vector<8x32xf32>
    %c0_23 = arith.constant 0 : index
    %c0_24 = arith.constant 0 : index
    %c0_25 = arith.constant 0 : index
    %22 = vector.load %arg5[%c0_23, %c0_24, %c0_25] : memref<2x64x96xf32, #tpu.memory_space<vmem>>, vector<1x64x96xf32>
    %23 = vector.shape_cast %22 : vector<1x64x96xf32> to vector<64x96xf32>
    %c1_26 = arith.constant 1 : index
    %c0_27 = arith.constant 0 : index
    %c0_28 = arith.constant 0 : index
    %24 = vector.load %arg5[%c1_26, %c0_27, %c0_28] : memref<2x64x96xf32, #tpu.memory_space<vmem>>, vector<1x64x96xf32>
    %25 = vector.shape_cast %24 : vector<1x64x96xf32> to vector<64x96xf32>
    %26 = vector.extract_strided_slice %23 {offsets = [0, 0], sizes = [32, 96], strides = [1, 1]} : vector<64x96xf32> to vector<32x96xf32>
    %cst_29 = arith.constant dense<0.000000e+00> : vector<8x96xf32>
    %27 = tpu.matmul %20, %26, %cst_29 {dimension_numbers = #tpu.dot_dimension_numbers<[1], [0], [0], [1], [0, 0, 1, 1], [], []>} : vector<8x32xf32>, vector<32x96xf32>, vector<8x96xf32> -> vector<8x96xf32>
    %28 = vector.extract_strided_slice %23 {offsets = [32, 0], sizes = [32, 96], strides = [1, 1]} : vector<64x96xf32> to vector<32x96xf32>
    %cst_30 = arith.constant dense<0.000000e+00> : vector<8x96xf32>
    %29 = tpu.matmul %21, %28, %cst_30 {dimension_numbers = #tpu.dot_dimension_numbers<[1], [0], [0], [1], [0, 0, 1, 1], [], []>} : vector<8x32xf32>, vector<32x96xf32>, vector<8x96xf32> -> vector<8x96xf32>
    %30 = arith.addf %27, %29 : vector<8x96xf32>
    %c0_31 = arith.constant 0 : index
    %c0_32 = arith.constant 0 : index
    %c0_33 = arith.constant 0 : index
    %31 = vector.load %arg7[%c0_31, %c0_32, %c0_33] : memref<2x1x96xf32, #tpu.memory_space<vmem>>, vector<1x1x96xf32>
    %32 = vector.shape_cast %31 : vector<1x1x96xf32> to vector<1x96xf32>
    %33 = vector.broadcast %32 : vector<1x96xf32> to vector<8x96xf32>
    %34 = arith.addf %30, %33 : vector<8x96xf32>
    %c0_34 = arith.constant 0 : index
    %c0_35 = arith.constant 0 : index
    %35 = vector.load %arg20[%c0_34, %c0_35] : memref<8x96xf32, #tpu.memory_space<vmem>>, vector<8x96xf32>
    tpu.vector_store %arg20[%c0_34, %c0_35], %34 {strides = array<i32>} : memref<8x96xf32, #tpu.memory_space<vmem>>, vector<8x96xf32>,
    %36 = vector.extract_strided_slice %25 {offsets = [0, 0], sizes = [32, 96], strides = [1, 1]} : vector<64x96xf32> to vector<32x96xf32>
    %cst_36 = arith.constant dense<0.000000e+00> : vector<8x96xf32>
    %37 = tpu.matmul %20, %36, %cst_36 {dimension_numbers = #tpu.dot_dimension_numbers<[1], [0], [0], [1], [0, 0, 1, 1], [], []>} : vector<8x32xf32>, vector<32x96xf32>, vector<8x96xf32> -> vector<8x96xf32>
    %38 = vector.extract_strided_slice %25 {offsets = [32, 0], sizes = [32, 96], strides = [1, 1]} : vector<64x96xf32> to vector<32x96xf32>
    %cst_37 = arith.constant dense<0.000000e+00> : vector<8x96xf32>
    %39 = tpu.matmul %21, %38, %cst_37 {dimension_numbers = #tpu.dot_dimension_numbers<[1], [0], [0], [1], [0, 0, 1, 1], [], []>} : vector<8x32xf32>, vector<32x96xf32>, vector<8x96xf32> -> vector<8x96xf32>
    %40 = arith.addf %37, %39 : vector<8x96xf32>
    %c1_38 = arith.constant 1 : index
    %c0_39 = arith.constant 0 : index
    %c0_40 = arith.constant 0 : index
    %41 = vector.load %arg7[%c1_38, %c0_39, %c0_40] : memref<2x1x96xf32, #tpu.memory_space<vmem>>, vector<1x1x96xf32>
    %42 = vector.shape_cast %41 : vector<1x1x96xf32> to vector<1x96xf32>
    %43 = vector.broadcast %42 : vector<1x96xf32> to vector<8x96xf32>
    %44 = arith.addf %40, %43 : vector<8x96xf32>
    %c0_41 = arith.constant 0 : index
    %c0_42 = arith.constant 0 : index
    %45 = vector.load %arg21[%c0_41, %c0_42] : memref<8x96xf32, #tpu.memory_space<vmem>>, vector<8x96xf32>
    tpu.vector_store %arg21[%c0_41, %c0_42], %44 {strides = array<i32>} : memref<8x96xf32, #tpu.memory_space<vmem>>, vector<8x96xf32>,
    %c0_i32_43 = arith.constant 0 : i32
    %c8_i32_44 = arith.constant 8 : i32
    %46 = arith.addi %c0_i32_43, %c8_i32_44 : i32
    %c1_i32_45 = arith.constant 1 : i32
    %47:2 = scf.for %arg26 = %c0_i32_43 to %46 step %c1_i32_45 iter_args(%arg27 = %0, %arg28 = %0) -> (vector<1x32xf32>, vector<1x32xf32>)  : i32 {
      %60 = arith.index_cast %arg26 : i32 to index
      %c0_61 = arith.constant 0 : index
      %61 = vector.load %arg20[%60, %c0_61] : memref<8x96xf32, #tpu.memory_space<vmem>>, vector<1x96xf32>
      %c0_62 = arith.constant 0 : index
      %c0_63 = arith.constant 0 : index
      %c0_64 = arith.constant 0 : index
      %62 = vector.load %arg6[%c0_62, %c0_63, %c0_64] : memref<2x32x96xf32, #tpu.memory_space<vmem>>, vector<1x32x96xf32>
      %63 = vector.shape_cast %62 : vector<1x32x96xf32> to vector<32x96xf32>
      %c0_65 = arith.constant 0 : index
      %c0_66 = arith.constant 0 : index
      %c0_67 = arith.constant 0 : index
      %64 = vector.load %arg8[%c0_65, %c0_66, %c0_67] : memref<2x1x96xf32, #tpu.memory_space<vmem>>, vector<1x1x96xf32>
      %65 = vector.shape_cast %64 : vector<1x1x96xf32> to vector<1x96xf32>
      %cst_68 = arith.constant dense<0.000000e+00> : vector<1x96xf32>
      %66 = tpu.matmul %arg27, %63, %cst_68 {dimension_numbers = #tpu.dot_dimension_numbers<[1], [0], [0], [1], [0, 0, 1, 1], [], []>} : vector<1x32xf32>, vector<32x96xf32>, vector<1x96xf32> -> vector<1x96xf32>
      %67 = arith.addf %66, %65 : vector<1x96xf32>
      %68 = vector.extract_strided_slice %61 {offsets = [0, 0], sizes = [1, 32], strides = [1, 1]} : vector<1x96xf32> to vector<1x32xf32>
      %69 = vector.extract_strided_slice %67 {offsets = [0, 0], sizes = [1, 32], strides = [1, 1]} : vector<1x96xf32> to vector<1x32xf32>
      %70 = arith.addf %68, %69 : vector<1x32xf32>
      %71 = arith.negf %70 : vector<1x32xf32>
      %72 = math.exp %71 : vector<1x32xf32>
      %cst_69 = arith.constant 1.000000e+00 : f32
      %73 = vector.broadcast %cst_69 : f32 to vector<1x32xf32>
      %74 = arith.addf %73, %72 : vector<1x32xf32>
      %75 = arith.divf %73, %74 : vector<1x32xf32>
      %76 = vector.extract_strided_slice %61 {offsets = [0, 32], sizes = [1, 32], strides = [1, 1]} : vector<1x96xf32> to vector<1x32xf32>
      %77 = vector.extract_strided_slice %67 {offsets = [0, 32], sizes = [1, 32], strides = [1, 1]} : vector<1x96xf32> to vector<1x32xf32>
      %78 = arith.addf %76, %77 : vector<1x32xf32>
      %79 = arith.negf %78 : vector<1x32xf32>
      %80 = math.exp %79 : vector<1x32xf32>
      %cst_70 = arith.constant 1.000000e+00 : f32
      %81 = vector.broadcast %cst_70 : f32 to vector<1x32xf32>
      %82 = arith.addf %81, %80 : vector<1x32xf32>
      %83 = arith.divf %81, %82 : vector<1x32xf32>
      %84 = vector.extract_strided_slice %61 {offsets = [0, 64], sizes = [1, 32], strides = [1, 1]} : vector<1x96xf32> to vector<1x32xf32>
      %85 = vector.extract_strided_slice %67 {offsets = [0, 64], sizes = [1, 32], strides = [1, 1]} : vector<1x96xf32> to vector<1x32xf32>
      %86 = arith.mulf %75, %85 : vector<1x32xf32>
      %87 = arith.addf %84, %86 : vector<1x32xf32>
      %88 = math.tanh %87 : vector<1x32xf32>
      %cst_71 = arith.constant 1.000000e+00 : f32
      %89 = vector.broadcast %cst_71 : f32 to vector<1x32xf32>
      %90 = arith.subf %89, %83 : vector<1x32xf32>
      %91 = arith.mulf %90, %88 : vector<1x32xf32>
      %92 = arith.mulf %83, %arg27 : vector<1x32xf32>
      %93 = arith.addf %91, %92 : vector<1x32xf32>
      %c7_i32 = arith.constant 7 : i32
      %94 = arith.subi %c7_i32, %arg26 : i32
      %95 = arith.index_cast %94 : i32 to index
      %c0_72 = arith.constant 0 : index
      %96 = vector.load %arg21[%95, %c0_72] : memref<8x96xf32, #tpu.memory_space<vmem>>, vector<1x96xf32>
      %c1_73 = arith.constant 1 : index
      %c0_74 = arith.constant 0 : index
      %c0_75 = arith.constant 0 : index
      %97 = vector.load %arg6[%c1_73, %c0_74, %c0_75] : memref<2x32x96xf32, #tpu.memory_space<vmem>>, vector<1x32x96xf32>
      %98 = vector.shape_cast %97 : vector<1x32x96xf32> to vector<32x96xf32>
      %c1_76 = arith.constant 1 : index
      %c0_77 = arith.constant 0 : index
      %c0_78 = arith.constant 0 : index
      %99 = vector.load %arg8[%c1_76, %c0_77, %c0_78] : memref<2x1x96xf32, #tpu.memory_space<vmem>>, vector<1x1x96xf32>
      %100 = vector.shape_cast %99 : vector<1x1x96xf32> to vector<1x96xf32>
      %cst_79 = arith.constant dense<0.000000e+00> : vector<1x96xf32>
      %101 = tpu.matmul %arg28, %98, %cst_79 {dimension_numbers = #tpu.dot_dimension_numbers<[1], [0], [0], [1], [0, 0, 1, 1], [], []>} : vector<1x32xf32>, vector<32x96xf32>, vector<1x96xf32> -> vector<1x96xf32>
      %102 = arith.addf %101, %100 : vector<1x96xf32>
      %103 = vector.extract_strided_slice %96 {offsets = [0, 0], sizes = [1, 32], strides = [1, 1]} : vector<1x96xf32> to vector<1x32xf32>
      %104 = vector.extract_strided_slice %102 {offsets = [0, 0], sizes = [1, 32], strides = [1, 1]} : vector<1x96xf32> to vector<1x32xf32>
      %105 = arith.addf %103, %104 : vector<1x32xf32>
      %106 = arith.negf %105 : vector<1x32xf32>
      %107 = math.exp %106 : vector<1x32xf32>
      %cst_80 = arith.constant 1.000000e+00 : f32
      %108 = vector.broadcast %cst_80 : f32 to vector<1x32xf32>
      %109 = arith.addf %108, %107 : vector<1x32xf32>
      %110 = arith.divf %108, %109 : vector<1x32xf32>
      %111 = vector.extract_strided_slice %96 {offsets = [0, 32], sizes = [1, 32], strides = [1, 1]} : vector<1x96xf32> to vector<1x32xf32>
      %112 = vector.extract_strided_slice %102 {offsets = [0, 32], sizes = [1, 32], strides = [1, 1]} : vector<1x96xf32> to vector<1x32xf32>
      %113 = arith.addf %111, %112 : vector<1x32xf32>
      %114 = arith.negf %113 : vector<1x32xf32>
      %115 = math.exp %114 : vector<1x32xf32>
      %cst_81 = arith.constant 1.000000e+00 : f32
      %116 = vector.broadcast %cst_81 : f32 to vector<1x32xf32>
      %117 = arith.addf %116, %115 : vector<1x32xf32>
      %118 = arith.divf %116, %117 : vector<1x32xf32>
      %119 = vector.extract_strided_slice %96 {offsets = [0, 64], sizes = [1, 32], strides = [1, 1]} : vector<1x96xf32> to vector<1x32xf32>
      %120 = vector.extract_strided_slice %102 {offsets = [0, 64], sizes = [1, 32], strides = [1, 1]} : vector<1x96xf32> to vector<1x32xf32>
      %121 = arith.mulf %110, %120 : vector<1x32xf32>
      %122 = arith.addf %119, %121 : vector<1x32xf32>
      %123 = math.tanh %122 : vector<1x32xf32>
      %cst_82 = arith.constant 1.000000e+00 : f32
      %124 = vector.broadcast %cst_82 : f32 to vector<1x32xf32>
      %125 = arith.subf %124, %118 : vector<1x32xf32>
      %126 = arith.mulf %125, %123 : vector<1x32xf32>
      %127 = arith.mulf %118, %arg28 : vector<1x32xf32>
      %128 = arith.addf %126, %127 : vector<1x32xf32>
      %129 = arith.index_cast %arg26 : i32 to index
      %c0_83 = arith.constant 0 : index
      %130 = vector.load %arg24[%129, %c0_83] : memref<8x32xf32, #tpu.memory_space<vmem>>, vector<1x32xf32>
      tpu.vector_store %arg24[%129, %c0_83], %93 {strides = array<i32>} : memref<8x32xf32, #tpu.memory_space<vmem>>, vector<1x32xf32>,
      %c7_i32_84 = arith.constant 7 : i32
      %131 = arith.subi %c7_i32_84, %arg26 : i32
      %132 = arith.index_cast %131 : i32 to index
      %c0_85 = arith.constant 0 : index
      %133 = vector.load %arg25[%132, %c0_85] : memref<8x32xf32, #tpu.memory_space<vmem>>, vector<1x32xf32>
      tpu.vector_store %arg25[%132, %c0_85], %128 {strides = array<i32>} : memref<8x32xf32, #tpu.memory_space<vmem>>, vector<1x32xf32>,
      scf.yield %93, %128 : vector<1x32xf32>, vector<1x32xf32>
    }
    %c8_i32_46 = arith.constant 8 : i32
    %c0_47 = arith.constant 0 : index
    %c0_48 = arith.constant 0 : index
    %48 = vector.load %arg24[%c0_47, %c0_48] : memref<8x32xf32, #tpu.memory_space<vmem>>, vector<8x32xf32>
    %c0_49 = arith.constant 0 : index
    %c0_50 = arith.constant 0 : index
    %49 = vector.load %arg25[%c0_49, %c0_50] : memref<8x32xf32, #tpu.memory_space<vmem>>, vector<8x32xf32>
    %50 = arith.addf %48, %49 : vector<8x32xf32>
    %51 = tpu.iota {dimensions = array<i32: 1>} : vector<1x64xi32>
    %52 = tpu.iota {dimensions = array<i32: 1>} : vector<1x6xi32>
    %c1_i32_51 = arith.constant 1 : i32
    %53 = vector.broadcast %c1_i32_51 : i32 to vector<1x1xi32>
    %c0_i32_52 = arith.constant 0 : i32
    %54 = vector.broadcast %c0_i32_52 : i32 to vector<1x6xi32>
    %cst_53 = arith.constant 0.000000e+00 : f32
    %55 = vector.broadcast %cst_53 : f32 to vector<1x6xf32>
    %c0_i32_54 = arith.constant 0 : i32
    %c6_i32 = arith.constant 6 : i32
    %56 = arith.addi %c0_i32_54, %c6_i32 : i32
    %c1_i32_55 = arith.constant 1 : i32
    %57:5 = scf.for %arg26 = %c0_i32_54 to %56 step %c1_i32_55 iter_args(%arg27 = %53, %arg28 = %19#0, %arg29 = %19#1, %arg30 = %54, %arg31 = %55) -> (vector<1x1xi32>, vector<1x32xf32>, vector<1x32xf32>, vector<1x6xi32>, vector<1x6xf32>)  : i32 {
      %60 = vector.broadcast %arg27 : vector<1x1xi32> to vector<1x64xi32>
      %61 = arith.cmpi eq, %51, %60 : vector<1x64xi32>
      %62 = arith.extui %61 : vector<1x64xi1> to vector<1x64xi32>
      %63 = arith.sitofp %62 : vector<1x64xi32> to vector<1x64xf32>
      %c0_61 = arith.constant 0 : index
      %c0_62 = arith.constant 0 : index
      %64 = vector.load %arg9[%c0_61, %c0_62] : memref<64x32xf32, #tpu.memory_space<vmem>>, vector<64x32xf32>
      %cst_63 = arith.constant dense<0.000000e+00> : vector<1x32xf32>
      %65 = tpu.matmul %63, %64, %cst_63 {dimension_numbers = #tpu.dot_dimension_numbers<[1], [0], [0], [1], [0, 0, 1, 1], [], []>} : vector<1x64xf32>, vector<64x32xf32>, vector<1x32xf32> -> vector<1x32xf32>
      %c0_64 = arith.constant 0 : index
      %c0_65 = arith.constant 0 : index
      %c0_66 = arith.constant 0 : index
      %66 = vector.load %arg10[%c0_64, %c0_65, %c0_66] : memref<2x32x96xf32, #tpu.memory_space<vmem>>, vector<1x32x96xf32>
      %67 = vector.shape_cast %66 : vector<1x32x96xf32> to vector<32x96xf32>
      %cst_67 = arith.constant dense<0.000000e+00> : vector<1x96xf32>
      %68 = tpu.matmul %65, %67, %cst_67 {dimension_numbers = #tpu.dot_dimension_numbers<[1], [0], [0], [1], [0, 0, 1, 1], [], []>} : vector<1x32xf32>, vector<32x96xf32>, vector<1x96xf32> -> vector<1x96xf32>
      %c0_68 = arith.constant 0 : index
      %c0_69 = arith.constant 0 : index
      %c0_70 = arith.constant 0 : index
      %69 = vector.load %arg12[%c0_68, %c0_69, %c0_70] : memref<2x1x96xf32, #tpu.memory_space<vmem>>, vector<1x1x96xf32>
      %70 = vector.shape_cast %69 : vector<1x1x96xf32> to vector<1x96xf32>
      %71 = arith.addf %68, %70 : vector<1x96xf32>
      %c0_71 = arith.constant 0 : index
      %c0_72 = arith.constant 0 : index
      %c0_73 = arith.constant 0 : index
      %72 = vector.load %arg11[%c0_71, %c0_72, %c0_73] : memref<2x32x96xf32, #tpu.memory_space<vmem>>, vector<1x32x96xf32>
      %73 = vector.shape_cast %72 : vector<1x32x96xf32> to vector<32x96xf32>
      %cst_74 = arith.constant dense<0.000000e+00> : vector<1x96xf32>
      %74 = tpu.matmul %arg28, %73, %cst_74 {dimension_numbers = #tpu.dot_dimension_numbers<[1], [0], [0], [1], [0, 0, 1, 1], [], []>} : vector<1x32xf32>, vector<32x96xf32>, vector<1x96xf32> -> vector<1x96xf32>
      %c0_75 = arith.constant 0 : index
      %c0_76 = arith.constant 0 : index
      %c0_77 = arith.constant 0 : index
      %75 = vector.load %arg13[%c0_75, %c0_76, %c0_77] : memref<2x1x96xf32, #tpu.memory_space<vmem>>, vector<1x1x96xf32>
      %76 = vector.shape_cast %75 : vector<1x1x96xf32> to vector<1x96xf32>
      %77 = arith.addf %74, %76 : vector<1x96xf32>
      %78 = vector.extract_strided_slice %71 {offsets = [0, 0], sizes = [1, 32], strides = [1, 1]} : vector<1x96xf32> to vector<1x32xf32>
      %79 = vector.extract_strided_slice %77 {offsets = [0, 0], sizes = [1, 32], strides = [1, 1]} : vector<1x96xf32> to vector<1x32xf32>
      %80 = arith.addf %78, %79 : vector<1x32xf32>
      %81 = arith.negf %80 : vector<1x32xf32>
      %82 = math.exp %81 : vector<1x32xf32>
      %cst_78 = arith.constant 1.000000e+00 : f32
      %83 = vector.broadcast %cst_78 : f32 to vector<1x32xf32>
      %84 = arith.addf %83, %82 : vector<1x32xf32>
      %85 = arith.divf %83, %84 : vector<1x32xf32>
      %86 = vector.extract_strided_slice %71 {offsets = [0, 32], sizes = [1, 32], strides = [1, 1]} : vector<1x96xf32> to vector<1x32xf32>
      %87 = vector.extract_strided_slice %77 {offsets = [0, 32], sizes = [1, 32], strides = [1, 1]} : vector<1x96xf32> to vector<1x32xf32>
      %88 = arith.addf %86, %87 : vector<1x32xf32>
      %89 = arith.negf %88 : vector<1x32xf32>
      %90 = math.exp %89 : vector<1x32xf32>
      %cst_79 = arith.constant 1.000000e+00 : f32
      %91 = vector.broadcast %cst_79 : f32 to vector<1x32xf32>
      %92 = arith.addf %91, %90 : vector<1x32xf32>
      %93 = arith.divf %91, %92 : vector<1x32xf32>
      %94 = vector.extract_strided_slice %71 {offsets = [0, 64], sizes = [1, 32], strides = [1, 1]} : vector<1x96xf32> to vector<1x32xf32>
      %95 = vector.extract_strided_slice %77 {offsets = [0, 64], sizes = [1, 32], strides = [1, 1]} : vector<1x96xf32> to vector<1x32xf32>
      %96 = arith.mulf %85, %95 : vector<1x32xf32>
      %97 = arith.addf %94, %96 : vector<1x32xf32>
      %98 = math.tanh %97 : vector<1x32xf32>
      %cst_80 = arith.constant 1.000000e+00 : f32
      %99 = vector.broadcast %cst_80 : f32 to vector<1x32xf32>
      %100 = arith.subf %99, %93 : vector<1x32xf32>
      %101 = arith.mulf %100, %98 : vector<1x32xf32>
      %102 = arith.mulf %93, %arg28 : vector<1x32xf32>
      %103 = arith.addf %101, %102 : vector<1x32xf32>
      %c1_81 = arith.constant 1 : index
      %c0_82 = arith.constant 0 : index
      %c0_83 = arith.constant 0 : index
      %104 = vector.load %arg10[%c1_81, %c0_82, %c0_83] : memref<2x32x96xf32, #tpu.memory_space<vmem>>, vector<1x32x96xf32>
      %105 = vector.shape_cast %104 : vector<1x32x96xf32> to vector<32x96xf32>
      %cst_84 = arith.constant dense<0.000000e+00> : vector<1x96xf32>
      %106 = tpu.matmul %103, %105, %cst_84 {dimension_numbers = #tpu.dot_dimension_numbers<[1], [0], [0], [1], [0, 0, 1, 1], [], []>} : vector<1x32xf32>, vector<32x96xf32>, vector<1x96xf32> -> vector<1x96xf32>
      %c1_85 = arith.constant 1 : index
      %c0_86 = arith.constant 0 : index
      %c0_87 = arith.constant 0 : index
      %107 = vector.load %arg12[%c1_85, %c0_86, %c0_87] : memref<2x1x96xf32, #tpu.memory_space<vmem>>, vector<1x1x96xf32>
      %108 = vector.shape_cast %107 : vector<1x1x96xf32> to vector<1x96xf32>
      %109 = arith.addf %106, %108 : vector<1x96xf32>
      %c1_88 = arith.constant 1 : index
      %c0_89 = arith.constant 0 : index
      %c0_90 = arith.constant 0 : index
      %110 = vector.load %arg11[%c1_88, %c0_89, %c0_90] : memref<2x32x96xf32, #tpu.memory_space<vmem>>, vector<1x32x96xf32>
      %111 = vector.shape_cast %110 : vector<1x32x96xf32> to vector<32x96xf32>
      %cst_91 = arith.constant dense<0.000000e+00> : vector<1x96xf32>
      %112 = tpu.matmul %arg29, %111, %cst_91 {dimension_numbers = #tpu.dot_dimension_numbers<[1], [0], [0], [1], [0, 0, 1, 1], [], []>} : vector<1x32xf32>, vector<32x96xf32>, vector<1x96xf32> -> vector<1x96xf32>
      %c1_92 = arith.constant 1 : index
      %c0_93 = arith.constant 0 : index
      %c0_94 = arith.constant 0 : index
      %113 = vector.load %arg13[%c1_92, %c0_93, %c0_94] : memref<2x1x96xf32, #tpu.memory_space<vmem>>, vector<1x1x96xf32>
      %114 = vector.shape_cast %113 : vector<1x1x96xf32> to vector<1x96xf32>
      %115 = arith.addf %112, %114 : vector<1x96xf32>
      %116 = vector.extract_strided_slice %109 {offsets = [0, 0], sizes = [1, 32], strides = [1, 1]} : vector<1x96xf32> to vector<1x32xf32>
      %117 = vector.extract_strided_slice %115 {offsets = [0, 0], sizes = [1, 32], strides = [1, 1]} : vector<1x96xf32> to vector<1x32xf32>
      %118 = arith.addf %116, %117 : vector<1x32xf32>
      %119 = arith.negf %118 : vector<1x32xf32>
      %120 = math.exp %119 : vector<1x32xf32>
      %cst_95 = arith.constant 1.000000e+00 : f32
      %121 = vector.broadcast %cst_95 : f32 to vector<1x32xf32>
      %122 = arith.addf %121, %120 : vector<1x32xf32>
      %123 = arith.divf %121, %122 : vector<1x32xf32>
      %124 = vector.extract_strided_slice %109 {offsets = [0, 32], sizes = [1, 32], strides = [1, 1]} : vector<1x96xf32> to vector<1x32xf32>
      %125 = vector.extract_strided_slice %115 {offsets = [0, 32], sizes = [1, 32], strides = [1, 1]} : vector<1x96xf32> to vector<1x32xf32>
      %126 = arith.addf %124, %125 : vector<1x32xf32>
      %127 = arith.negf %126 : vector<1x32xf32>
      %128 = math.exp %127 : vector<1x32xf32>
      %cst_96 = arith.constant 1.000000e+00 : f32
      %129 = vector.broadcast %cst_96 : f32 to vector<1x32xf32>
      %130 = arith.addf %129, %128 : vector<1x32xf32>
      %131 = arith.divf %129, %130 : vector<1x32xf32>
      %132 = vector.extract_strided_slice %109 {offsets = [0, 64], sizes = [1, 32], strides = [1, 1]} : vector<1x96xf32> to vector<1x32xf32>
      %133 = vector.extract_strided_slice %115 {offsets = [0, 64], sizes = [1, 32], strides = [1, 1]} : vector<1x96xf32> to vector<1x32xf32>
      %134 = arith.mulf %123, %133 : vector<1x32xf32>
      %135 = arith.addf %132, %134 : vector<1x32xf32>
      %136 = math.tanh %135 : vector<1x32xf32>
      %cst_97 = arith.constant 1.000000e+00 : f32
      %137 = vector.broadcast %cst_97 : f32 to vector<1x32xf32>
      %138 = arith.subf %137, %131 : vector<1x32xf32>
      %139 = arith.mulf %138, %136 : vector<1x32xf32>
      %140 = arith.mulf %131, %arg29 : vector<1x32xf32>
      %141 = arith.addf %139, %140 : vector<1x32xf32>
      "tpu.trace_start"() <{level = 10 : i32, message = "qh,th->qt"}> : () -> ()
      %cst_98 = arith.constant dense<0.000000e+00> : vector<1x8xf32>
      %142 = tpu.matmul %141, %50, %cst_98 {dimension_numbers = #tpu.dot_dimension_numbers<[1], [1], [0], [0], [0, 0, 1, 0], [], []>} : vector<1x32xf32>, vector<8x32xf32>, vector<1x8xf32> -> vector<1x8xf32>
      "tpu.trace_stop"() : () -> ()
      %cst_99 = arith.constant dense<0xFF800000> : vector<1xf32>
      %143 = vector.multi_reduction <maximumf>, %142, %cst_99 [1] : vector<1x8xf32> to vector<1xf32>
      %cst_100 = arith.constant 0xFF800000 : f32
      %144 = vector.broadcast %cst_100 : f32 to vector<1xf32>
      %145 = arith.maximumf %144, %143 : vector<1xf32>
      %146 = vector.shape_cast %145 : vector<1xf32> to vector<1x1xf32>
      %147 = vector.broadcast %146 : vector<1x1xf32> to vector<1x8xf32>
      %148 = arith.subf %142, %147 : vector<1x8xf32>
      %149 = math.exp %148 : vector<1x8xf32>
      %cst_101 = arith.constant dense<0.000000e+00> : vector<1xf32>
      %150 = vector.multi_reduction <add>, %149, %cst_101 [1] : vector<1x8xf32> to vector<1xf32>
      %151 = vector.shape_cast %150 : vector<1xf32> to vector<1x1xf32>
      %152 = vector.broadcast %151 : vector<1x1xf32> to vector<1x8xf32>
      %153 = arith.divf %149, %152 : vector<1x8xf32>
      %cst_102 = arith.constant dense<0.000000e+00> : vector<1x32xf32>
      %154 = tpu.matmul %153, %50, %cst_102 {dimension_numbers = #tpu.dot_dimension_numbers<[1], [0], [0], [1], [0, 0, 1, 1], [], []>} : vector<1x8xf32>, vector<8x32xf32>, vector<1x32xf32> -> vector<1x32xf32>
      %c0_103 = arith.constant 0 : index
      %c0_104 = arith.constant 0 : index
      %c0_105 = arith.constant 0 : index
      %155 = vector.load %arg14[%c0_103, %c0_104, %c0_105] : memref<2x32x32xf32, #tpu.memory_space<vmem>>, vector<1x32x32xf32>
      %156 = vector.shape_cast %155 : vector<1x32x32xf32> to vector<32x32xf32>
      %cst_106 = arith.constant dense<0.000000e+00> : vector<1x32xf32>
      %157 = tpu.matmul %141, %156, %cst_106 {dimension_numbers = #tpu.dot_dimension_numbers<[1], [0], [0], [1], [0, 0, 1, 1], [], []>} : vector<1x32xf32>, vector<32x32xf32>, vector<1x32xf32> -> vector<1x32xf32>
      %c1_107 = arith.constant 1 : index
      %c0_108 = arith.constant 0 : index
      %c0_109 = arith.constant 0 : index
      %158 = vector.load %arg14[%c1_107, %c0_108, %c0_109] : memref<2x32x32xf32, #tpu.memory_space<vmem>>, vector<1x32x32xf32>
      %159 = vector.shape_cast %158 : vector<1x32x32xf32> to vector<32x32xf32>
      %cst_110 = arith.constant dense<0.000000e+00> : vector<1x32xf32>
      %160 = tpu.matmul %154, %159, %cst_110 {dimension_numbers = #tpu.dot_dimension_numbers<[1], [0], [0], [1], [0, 0, 1, 1], [], []>} : vector<1x32xf32>, vector<32x32xf32>, vector<1x32xf32> -> vector<1x32xf32>
      %161 = arith.addf %157, %160 : vector<1x32xf32>
      %c0_111 = arith.constant 0 : index
      %c0_112 = arith.constant 0 : index
      %162 = vector.load %arg15[%c0_111, %c0_112] : memref<1x32xf32, #tpu.memory_space<vmem>>, vector<1x32xf32>
      %163 = arith.addf %161, %162 : vector<1x32xf32>
      %164 = math.tanh %163 : vector<1x32xf32>
      %c0_113 = arith.constant 0 : index
      %c0_114 = arith.constant 0 : index
      %165 = vector.load %arg16[%c0_113, %c0_114] : memref<32x64xf32, #tpu.memory_space<vmem>>, vector<32x64xf32>
      %cst_115 = arith.constant dense<0.000000e+00> : vector<1x64xf32>
      %166 = tpu.matmul %164, %165, %cst_115 {dimension_numbers = #tpu.dot_dimension_numbers<[1], [0], [0], [1], [0, 0, 1, 1], [], []>} : vector<1x32xf32>, vector<32x64xf32>, vector<1x64xf32> -> vector<1x64xf32>
      %c0_116 = arith.constant 0 : index
      %c0_117 = arith.constant 0 : index
      %167 = vector.load %arg17[%c0_116, %c0_117] : memref<1x64xf32, #tpu.memory_space<vmem>>, vector<1x64xf32>
      %168 = arith.addf %166, %167 : vector<1x64xf32>
      %cst_118 = arith.constant dense<0xFF800000> : vector<1xf32>
      %169 = vector.multi_reduction <maximumf>, %168, %cst_118 [1] : vector<1x64xf32> to vector<1xf32>
      %170 = vector.shape_cast %169 : vector<1xf32> to vector<1x1xf32>
      %171 = vector.broadcast %170 : vector<1x1xf32> to vector<1x64xf32>
      %172 = arith.subf %168, %171 : vector<1x64xf32>
      %173 = math.exp %172 : vector<1x64xf32>
      %cst_119 = arith.constant dense<0.000000e+00> : vector<1xf32>
      %174 = vector.multi_reduction <add>, %173, %cst_119 [1] : vector<1x64xf32> to vector<1xf32>
      %175 = vector.shape_cast %174 : vector<1xf32> to vector<1x1xf32>
      %176 = tpu.reciprocal %175 {approx = true} : vector<1x1xf32> -> vector<1x1xf32>
      %177 = vector.broadcast %170 : vector<1x1xf32> to vector<1x64xf32>
      %178 = arith.cmpf oge, %168, %177 : vector<1x64xf32>
      %c64_i32 = arith.constant 64 : i32
      %179 = vector.broadcast %c64_i32 : i32 to vector<1x64xi32>
      %180 = arith.select %178, %51, %179 : vector<1x64xi1>, vector<1x64xi32>
      %cst_120 = arith.constant dense<2147483647> : vector<1xi32>
      %181 = vector.multi_reduction <minsi>, %180, %cst_120 [1] : vector<1x64xi32> to vector<1xi32>
      %182 = vector.shape_cast %181 : vector<1xi32> to vector<1x1xi32>
      %183 = vector.broadcast %arg26 : i32 to vector<1x6xi32>
      %184 = arith.cmpi eq, %52, %183 : vector<1x6xi32>
      %185 = vector.shape_cast %182 : vector<1x1xi32> to vector<1x1xi32>
      %186 = vector.broadcast %185 : vector<1x1xi32> to vector<1x6xi32>
      %187 = arith.select %184, %186, %arg30 : vector<1x6xi1>, vector<1x6xi32>
      %188 = vector.shape_cast %176 : vector<1x1xf32> to vector<1x1xf32>
      %189 = vector.broadcast %188 : vector<1x1xf32> to vector<1x6xf32>
      %190 = arith.select %184, %189, %arg31 : vector<1x6xi1>, vector<1x6xf32>
      scf.yield %182, %103, %141, %187, %190 : vector<1x1xi32>, vector<1x32xf32>, vector<1x32xf32>, vector<1x6xi32>, vector<1x6xf32>
    }
    %c6_i32_56 = arith.constant 6 : i32
    %c0_57 = arith.constant 0 : index
    %c0_58 = arith.constant 0 : index
    %58 = vector.load %arg18[%c0_57, %c0_58] : memref<1x6xi32, #tpu.memory_space<vmem>>, vector<1x6xi32>
    tpu.vector_store %arg18[%c0_57, %c0_58], %57#3 {strides = array<i32>} : memref<1x6xi32, #tpu.memory_space<vmem>>, vector<1x6xi32>,
    %c0_59 = arith.constant 0 : index
    %c0_60 = arith.constant 0 : index
    %59 = vector.load %arg19[%c0_59, %c0_60] : memref<1x6xf32, #tpu.memory_space<vmem>>, vector<1x6xf32>
    tpu.vector_store %arg19[%c0_59, %c0_60], %57#4 {strides = array<i32>} : memref<1x6xf32, #tpu.memory_space<vmem>>, vector<1x6xf32>,
    return
  }
}

</mosaic_0001>

<llo_original>
// kernel: _greedy_search_decode.1
$region0: #{_greedy_search_decode.1}
  #allocation0 [shape = 'u32[]', space=smem, size = 0x4, offset = 0x4, fixed_abs, tag = 'smem constant byte address 0x4 - core index']
  #allocation1 [shape = 'u32[144,128]{1,0:T(1,128)}', space=vmem, size = 0x12000, scoped, tag = 'internal scratch']
  #allocation2 [shape = 'f32[8,96]{1,0:T(8,128)}', space=vmem, size = 0x1000, scoped, tag = 'scratch operand']
  #allocation3 [shape = 'f32[8,96]{1,0:T(8,128)}', space=vmem, size = 0x1000, scoped, tag = 'scratch operand']
  #allocation4 [shape = 'f32[8,32]{1,0:T(8,128)}', space=vmem, size = 0x1000, scoped, tag = 'scratch operand']
  #allocation5 [shape = 'f32[8,32]{1,0:T(8,128)}', space=vmem, size = 0x1000, scoped, tag = 'scratch operand']
  #allocation6 [shape = 'f32[8,32]{1,0:T(8,128)}', space=vmem, size = 0x1000, scoped, tag = 'scratch operand']
  #allocation7 [shape = 'f32[8,32]{1,0:T(8,128)}', space=vmem, size = 0x1000, scoped, tag = 'scratch operand']
  %s0 = inlined_call_operand.vmem [shape: f32[8,32], index: 0, kind: input, shape index: {}]
  %s1 = inlined_call_operand.vmem [shape: f32[2,32,96], index: 1, kind: input, shape index: {}]
  %s2 = inlined_call_operand.hbm [shape: f32[2,32,96], index: 2, kind: input, shape index: {}]
  %s3 = inlined_call_operand.vmem [shape: f32[2,1,96], index: 3, kind: input, shape index: {}]
  %s4 = inlined_call_operand.vmem [shape: f32[2,1,96], index: 4, kind: input, shape index: {}]
  %s5 = inlined_call_operand.vmem [shape: f32[2,64,96], index: 5, kind: input, shape index: {}]
  %s6 = inlined_call_operand.hbm [shape: f32[2,32,96], index: 6, kind: input, shape index: {}]
  %s7 = inlined_call_operand.vmem [shape: f32[2,1,96], index: 7, kind: input, shape index: {}]
  %s8 = inlined_call_operand.vmem [shape: f32[2,1,96], index: 8, kind: input, shape index: {}]
  %s9 = inlined_call_operand.vmem [shape: f32[64,32], index: 9, kind: input, shape index: {}]
  %s10 = inlined_call_operand.hbm [shape: f32[2,32,96], index: 10, kind: input, shape index: {}]
  %s11 = inlined_call_operand.hbm [shape: f32[2,32,96], index: 11, kind: input, shape index: {}]
  %s12 = inlined_call_operand.vmem [shape: f32[2,1,96], index: 12, kind: input, shape index: {}]
  %s13 = inlined_call_operand.vmem [shape: f32[2,1,96], index: 13, kind: input, shape index: {}]
  %s14 = inlined_call_operand.hbm [shape: f32[2,32,32], index: 14, kind: input, shape index: {}]
  %s15 = inlined_call_operand.vmem [shape: f32[1,32], index: 15, kind: input, shape index: {}]
  %s16 = inlined_call_operand.vmem [shape: f32[32,64], index: 16, kind: input, shape index: {}]
  %s17 = inlined_call_operand.vmem [shape: f32[1,64], index: 17, kind: input, shape index: {}]
  %s18 = inlined_call_operand.hbm [shape: s32[1,6], index: 18, kind: output, shape index: {0}]
  %s19 = inlined_call_operand.hbm [shape: f32[1,6], index: 19, kind: output, shape index: {1}]
  %20 = xla_tuple %s18, %s19
  %s21 = sld [smem:[#allocation0]]
  $region131: #{_greedy_search_decode.1} parent=0
    _
  %s23 = ssub.s32 1, %s21
  %s24 = scalar_select 0, %s23, %s21
  $region1: #{_greedy_search_decode.1} parent=0
    #allocation8 [shape = 'u8[32768]{0}', space=vmem, size = 0x8000, scoped, tag = 'input window, operand 2, single buffered']
    #allocation9 [shape = 's32[1]{0}', space=sflag, size = 0x4, scoped, tag = 'scoped memory for _greedy_search_decode.1']
    #allocation10 [shape = 's32[1]{0}', space=sflag, size = 0x4, scoped, tag = 'scoped memory for _greedy_search_decode.1']
    #allocation11 [shape = 'u8[32768]{0}', space=vmem, size = 0x8000, scoped, tag = 'input window, operand 6, single buffered']
    #allocation12 [shape = 's32[1]{0}', space=sflag, size = 0x4, scoped, tag = 'scoped memory for _greedy_search_decode.1']
    #allocation13 [shape = 'u8[32768]{0}', space=vmem, size = 0x8000, scoped, tag = 'input window, operand 10, single buffered']
    #allocation14 [shape = 'u8[32768]{0}', space=vmem, size = 0x8000, scoped, tag = 'input window, operand 11, single buffered']
    #allocation15 [shape = 's32[1]{0}', space=sflag, size = 0x4, scoped, tag = 'scoped memory for _greedy_search_decode.1']
    #allocation16 [shape = 'u8[32768]{0}', space=vmem, size = 0x8000, scoped, tag = 'input window, operand 14, single buffered']
    #allocation17 [shape = 'u8[512]{0}', space=vmem, size = 0x400, scoped, tag = 'output window, operand 0, single buffered']
    #allocation18 [shape = 'u8[512]{0}', space=vmem, size = 0x400, scoped, tag = 'output window, operand 1, single buffered']
    #allocation19 [shape = 's32[1]{0}', space=sflag, size = 0x4, scoped, tag = 'scoped memory for _greedy_search_decode.1']
    %25 = vsyncpa [#allocation9], 0
    %26 = vsyncpa [#allocation12], 0
    %27 = vsyncpa [#allocation15], 0
    %28 = vsyncpa [#allocation10], 0
    %29 = vsyncpa [#allocation19], 0
    // Predicated region
    $region2: #{_greedy_search_decode.1} parent=1 // pred_check
      _
    $region3: #{_greedy_search_decode.1} parent=1 // pred_check_branch
      %31 = sbr.rel (0) target = $region5
    $region4: #{_greedy_search_decode.1} parent=1 // pred_region
      _
    $region5: #{_greedy_search_decode.1} parent=1 // pred_fallthru
      _
    // Predicated region
    $region6: #{_greedy_search_decode.1} parent=1 // pred_check
      _
    $region7: #{_greedy_search_decode.1} parent=1 // pred_check_branch
      %33 = sbr.rel (0) target = $region9
    $region8: #{_greedy_search_decode.1} parent=1 // pred_region
      _
    $region9: #{_greedy_search_decode.1} parent=1 // pred_fallthru
      _
    // Predicated region
    $region10: #{_greedy_search_decode.1} parent=1 // pred_check
      _
    $region11: #{_greedy_search_decode.1} parent=1 // pred_check_branch
      %35 = sbr.rel (0) target = $region13
    $region12: #{_greedy_search_decode.1} parent=1 // pred_region
      %s37 = ssub.s32 1024, 1024
      %38 = vsyncadd [#allocation9], %s37
      %s39 = sshll.u32 [#allocation8], 4
      %s40 = int_to_ptr.vmem [resolvable:$true] %s39
      %45 = dma.hbm_to_vmem [thread:$0]  %s2, 1024, %s40, [#allocation9], 128, 128, 8
    $region13: #{_greedy_search_decode.1} parent=1 // pred_fallthru
      _
    // Predicated region
    $region14: #{_greedy_search_decode.1} parent=1 // pred_check
      _
    $region15: #{_greedy_search_decode.1} parent=1 // pred_check_branch
      %47 = sbr.rel (0) target = $region17
    $region16: #{_greedy_search_decode.1} parent=1 // pred_region
      _
    $region17: #{_greedy_search_decode.1} parent=1 // pred_fallthru
      _
    // Predicated region
    $region18: #{_greedy_search_decode.1} parent=1 // pred_check
      _
    $region19: #{_greedy_search_decode.1} parent=1 // pred_check_branch
      %49 = sbr.rel (0) target = $region21
    $region20: #{_greedy_search_decode.1} parent=1 // pred_region
      _
    $region21: #{_greedy_search_decode.1} parent=1 // pred_fallthru
      _
    // Predicated region
    $region22: #{_greedy_search_decode.1} parent=1 // pred_check
      _
    $region23: #{_greedy_search_decode.1} parent=1 // pred_check_branch
      %51 = sbr.rel (0) target = $region25
    $region24: #{_greedy_search_decode.1} parent=1 // pred_region
      _
    $region25: #{_greedy_search_decode.1} parent=1 // pred_fallthru
      _
    // Predicated region
    $region26: #{_greedy_search_decode.1} parent=1 // pred_check
      _
    $region27: #{_greedy_search_decode.1} parent=1 // pred_check_branch
      %53 = sbr.rel (0) target = $region29
    $region28: #{_greedy_search_decode.1} parent=1 // pred_region
      %s55 = ssub.s32 1024, 1024
      %56 = vsyncadd [#allocation12], %s55
      %s57 = sshll.u32 [#allocation11], 4
      %s58 = int_to_ptr.vmem [resolvable:$true] %s57
      %63 = dma.hbm_to_vmem [thread:$0]  %s6, 1024, %s58, [#allocation12], 128, 128, 8
    $region29: #{_greedy_search_decode.1} parent=1 // pred_fallthru
      _
    // Predicated region
    $region30: #{_greedy_search_decode.1} parent=1 // pred_check
      _
    $region31: #{_greedy_search_decode.1} parent=1 // pred_check_branch
      %65 = sbr.rel (0) target = $region33
    $region32: #{_greedy_search_decode.1} parent=1 // pred_region
      _
    $region33: #{_greedy_search_decode.1} parent=1 // pred_fallthru
      _
    // Predicated region
    $region34: #{_greedy_search_decode.1} parent=1 // pred_check
      _
    $region35: #{_greedy_search_decode.1} parent=1 // pred_check_branch
      %67 = sbr.rel (0) target = $region37
    $region36: #{_greedy_search_decode.1} parent=1 // pred_region
      _
    $region37: #{_greedy_search_decode.1} parent=1 // pred_fallthru
      _
    // Predicated region
    $region38: #{_greedy_search_decode.1} parent=1 // pred_check
      _
    $region39: #{_greedy_search_decode.1} parent=1 // pred_check_branch
      %69 = sbr.rel (0) target = $region41
    $region40: #{_greedy_search_decode.1} parent=1 // pred_region
      _
    $region41: #{_greedy_search_decode.1} parent=1 // pred_fallthru
      _
    // Predicated region
    $region42: #{_greedy_search_decode.1} parent=1 // pred_check
      _
    $region43: #{_greedy_search_decode.1} parent=1 // pred_check_branch
      %71 = sbr.rel (0) target = $region45
    $region44: #{_greedy_search_decode.1} parent=1 // pred_region
      %s73 = ssub.s32 1024, 1024
      %74 = vsyncadd [#allocation12], %s73
      %s75 = sshll.u32 [#allocation13], 4
      %s76 = int_to_ptr.vmem [resolvable:$true] %s75
      %81 = dma.hbm_to_vmem [thread:$0]  %s10, 1024, %s76, [#allocation12], 128, 128, 8
    $region45: #{_greedy_search_decode.1} parent=1 // pred_fallthru
      _
    // Predicated region
    $region46: #{_greedy_search_decode.1} parent=1 // pred_check
      _
    $region47: #{_greedy_search_decode.1} parent=1 // pred_check_branch
      %83 = sbr.rel (0) target = $region49
    $region48: #{_greedy_search_decode.1} parent=1 // pred_region
      %s85 = ssub.s32 1024, 1024
      %86 = vsyncadd [#allocation15], %s85
      %s87 = sshll.u32 [#allocation14], 4
      %s88 = int_to_ptr.vmem [resolvable:$true] %s87
      %93 = dma.hbm_to_vmem [thread:$0]  %s11, 1024, %s88, [#allocation15], 128, 128, 8
    $region49: #{_greedy_search_decode.1} parent=1 // pred_fallthru
      _
    // Predicated region
    $region50: #{_greedy_search_decode.1} parent=1 // pred_check
      _
    $region51: #{_greedy_search_decode.1} parent=1 // pred_check_branch
      %95 = sbr.rel (0) target = $region53
    $region52: #{_greedy_search_decode.1} parent=1 // pred_region
      _
    $region53: #{_greedy_search_decode.1} parent=1 // pred_fallthru
      _
    // Predicated region
    $region54: #{_greedy_search_decode.1} parent=1 // pred_check
      _
    $region55: #{_greedy_search_decode.1} parent=1 // pred_check_branch
      %97 = sbr.rel (0) target = $region57
    $region56: #{_greedy_search_decode.1} parent=1 // pred_region
      _
    $region57: #{_greedy_search_decode.1} parent=1 // pred_fallthru
      _
    // Predicated region
    $region58: #{_greedy_search_decode.1} parent=1 // pred_check
      _
    $region59: #{_greedy_search_decode.1} parent=1 // pred_check_branch
      %99 = sbr.rel (0) target = $region61
    $region60: #{_greedy_search_decode.1} parent=1 // pred_region
      %s101 = ssub.s32 1024, 1024
      %102 = vsyncadd [#allocation15], %s101
      %s103 = sshll.u32 [#allocation16], 4
      %s104 = int_to_ptr.vmem [resolvable:$true] %s103
      %109 = dma.hbm_to_vmem [thread:$0]  %s14, 1024, %s104, [#allocation15], 128, 128, 8
    $region61: #{_greedy_search_decode.1} parent=1 // pred_fallthru
      _
    // Predicated region
    $region62: #{_greedy_search_decode.1} parent=1 // pred_check
      _
    $region63: #{_greedy_search_decode.1} parent=1 // pred_check_branch
      %111 = sbr.rel (0) target = $region65
    $region64: #{_greedy_search_decode.1} parent=1 // pred_region
      _
    $region65: #{_greedy_search_decode.1} parent=1 // pred_fallthru
      _
    // Predicated region
    $region66: #{_greedy_search_decode.1} parent=1 // pred_check
      _
    $region67: #{_greedy_search_decode.1} parent=1 // pred_check_branch
      %113 = sbr.rel (0) target = $region69
    $region68: #{_greedy_search_decode.1} parent=1 // pred_region
      _
    $region69: #{_greedy_search_decode.1} parent=1 // pred_fallthru
      _
    // Predicated region
    $region70: #{_greedy_search_decode.1} parent=1 // pred_check
      _
    $region71: #{_greedy_search_decode.1} parent=1 // pred_check_branch
      %115 = sbr.rel (0) target = $region73
    $region72: #{_greedy_search_decode.1} parent=1 // pred_region
      _
    $region73: #{_greedy_search_decode.1} parent=1 // pred_fallthru
      _
    // Predicated region
    $region74: #{_greedy_search_decode.1} parent=1 // pred_check
      _
    $region75: #{_greedy_search_decode.1} parent=1 // pred_check_branch
      %117 = sbr.rel (0) target = $region77
    $region76: #{_greedy_search_decode.1} parent=1 // pred_region
      %118 = dma.done [#allocation9], 1024
    $region77: #{_greedy_search_decode.1} parent=1 // pred_fallthru
      _
    // Predicated region
    $region78: #{_greedy_search_decode.1} parent=1 // pred_check
      _
    $region79: #{_greedy_search_decode.1} parent=1 // pred_check_branch
      %120 = sbr.rel (0) target = $region81
    $region80: #{_greedy_search_decode.1} parent=1 // pred_region
      %121 = dma.done [#allocation12], 1024
    $region81: #{_greedy_search_decode.1} parent=1 // pred_fallthru
      _
    // Predicated region
    $region82: #{_greedy_search_decode.1} parent=1 // pred_check
      _
    $region83: #{_greedy_search_decode.1} parent=1 // pred_check_branch
      %123 = sbr.rel (0) target = $region85
    $region84: #{_greedy_search_decode.1} parent=1 // pred_region
      %124 = dma.done [#allocation12], 1024
    $region85: #{_greedy_search_decode.1} parent=1 // pred_fallthru
      _
    // Predicated region
    $region86: #{_greedy_search_decode.1} parent=1 // pred_check
      _
    $region87: #{_greedy_search_decode.1} parent=1 // pred_check_branch
      %126 = sbr.rel (0) target = $region89
    $region88: #{_greedy_search_decode.1} parent=1 // pred_region
      %127 = dma.done [#allocation15], 1024
    $region89: #{_greedy_search_decode.1} parent=1 // pred_fallthru
      _
    // Predicated region
    $region90: #{_greedy_search_decode.1} parent=1 // pred_check
      _
    $region91: #{_greedy_search_decode.1} parent=1 // pred_check_branch
      %129 = sbr.rel (0) target = $region93
    $region92: #{_greedy_search_decode.1} parent=1 // pred_region
      %130 = dma.done [#allocation15], 1024
    $region93: #{_greedy_search_decode.1} parent=1 // pred_fallthru
      _
    %v131 = vld [vmem:[%s0] sm:$0xff]
    %v132 = vld [vmem:[%s1] sm:$0xff]
    %v133 = vld [vmem:[%s1 + $0x8] sm:$0xff]
    %v134 = vld [vmem:[%s1 + $0x10] sm:$0xff]
    %v135 = vld [vmem:[%s1 + $0x18] sm:$0xff]
    %v136 = vld [vmem:[%s3] sm:$0x1]
    %v138 = vlaneseq
    %v139 = vshrl.u32 %v138, 7
    %v140 = vsub.s32 0, %v139
    %v141 = vrot.slane %v136, %v140
    %vm143 = vcmask 261120
    %v145 = vsel %vm143, %v131, 0
    %147 = vmatprep.subr.mxu0 0.0
    %148 = vmatpush1.msra.mxu0 %v132
    %149 = vmatprep.subr.mxu0 0.0
    %150 = vmatpush1.msra.mxu0 %v133
    %151 = vmatprep.subr.mxu0 0.0
    %152 = vmatpush1.msra.mxu0 %v134
    %153 = vmatprep.subr.mxu0 0.0
    %154 = vmatpush1.msra.mxu0 %v135
    %155 = vmatprep.subr.mxu0 0.0
    %156 = vmatpush1.msra.mxu0 0.0
    %157 = vmatprep.subr.mxu0 0.0
    %158 = vmatpush1.msra.mxu0 0.0
    %159 = vmatprep.subr.mxu0 0.0
    %160 = vmatpush1.msra.mxu0 0.0
    %161 = vmatprep.subr.mxu0 0.0
    %162 = vmatpush1.msra.mxu0 0.0
    %163 = vmatprep.subr.mxu0 0.0
    %164 = vmatpush1.msra.mxu0 0.0
    %165 = vmatprep.subr.mxu0 0.0
    %166 = vmatpush1.msra.mxu0 0.0
    %167 = vmatprep.subr.mxu0 0.0
    %168 = vmatpush1.msra.mxu0 0.0
    %169 = vmatprep.subr.mxu0 0.0
    %170 = vmatpush1.msra.mxu0 0.0
    %171 = vmatprep.subr.mxu0 0.0
    %172 = vmatpush1.msra.mxu0 0.0
    %173 = vmatprep.subr.mxu0 0.0
    %174 = vmatpush1.msra.mxu0 0.0
    %175 = vmatprep.subr.mxu0 0.0
    %176 = vmatpush1.msra.mxu0 0.0
    %177 = vmatprep.subr.mxu0 0.0
    %178 = vmatpush1.msra.mxu0 0.0
    %179 = vmatprep.subr.mxu0 0.0
    %180 = vmatpush1.msra.mxu0 0.0
    %181 = vmatprep.subr.mxu0 0.0
    %182 = vmatpush1.msra.mxu0 0.0
    %183 = vmatprep.subr.mxu0 0.0
    %184 = vmatpush1.msra.mxu0 0.0
    %185 = vmatprep.subr.mxu0 0.0
    %186 = vmatpush1.msra.mxu0 0.0
    %187 = vmatprep.subr.mxu0 0.0
    %188 = vmatpush1.msra.mxu0 0.0
    %189 = vmatprep.subr.mxu0 0.0
    %190 = vmatpush1.msra.mxu0 0.0
    %191 = vmatprep.subr.mxu0 0.0
    %192 = vmatpush1.msra.mxu0 0.0
    %193 = vmatprep.subr.mxu0 0.0
    %194 = vmatpush1.msra.mxu0 0.0
    %195 = vmatprep.subr.mxu0 0.0
    %196 = vmatpush1.msra.mxu0 0.0
    %197 = vmatprep.subr.mxu0 0.0
    %198 = vmatpush1.msra.mxu0 0.0
    %199 = vmatprep.subr.mxu0 0.0
    %200 = vmatpush1.msra.mxu0 0.0
    %201 = vmatprep.subr.mxu0 0.0
    %202 = vmatpush1.msra.mxu0 0.0
    %203 = vmatprep.subr.mxu0 0.0
    %204 = vmatpush1.msra.mxu0 0.0
    %205 = vmatprep.subr.mxu0 0.0
    %206 = vmatpush1.msra.mxu0 0.0
    %207 = vmatprep.subr.mxu0 0.0
    %208 = vmatpush1.msra.mxu0 0.0
    %209 = vmatprep.subr.mxu0 0.0
    %210 = vmatpush1.msra.mxu0 0.0
    %211 = vmatprep.mubr.f32.mxu0 0.0
    %212 = vmatmul.mubr.f32.gmra.mrb[0].mxu0 %v145
    %v213 = vpop.f32.mrb[0].mxu0
    %v214 = vadd.f32 %v141, %v213
    %v215 = vpop.f32.mrb[0].mxu0
    %216 = vdwg.mxu0
    %vm217 = vcmask 785408
    %218 = vst.msk [vmem:[#allocation2] sm:$0xff] %vm217, %v214
    %s219 = scalar_lea.vmem %s1, 32
    %v220 = vld [vmem:[%s219] sm:$0xff]
    %v221 = vld [vmem:[%s219 + $0x8] sm:$0xff]
    %v222 = vld [vmem:[%s219 + $0x10] sm:$0xff]
    %v223 = vld [vmem:[%s219 + $0x18] sm:$0xff]
    %s224 = scalar_lea.vmem %s3, 1
    %v225 = vld [vmem:[%s224] sm:$0x1]
    %v227 = vlaneseq
    %v228 = vshrl.u32 %v227, 7
    %v229 = vsub.s32 0, %v228
    %v230 = vrot.slane %v225, %v229
    %232 = vmatprep.subr.mxu0 0.0
    %233 = vmatpush1.msra.mxu0 %v220
    %234 = vmatprep.subr.mxu0 0.0
    %235 = vmatpush1.msra.mxu0 %v221
    %236 = vmatprep.subr.mxu0 0.0
    %237 = vmatpush1.msra.mxu0 %v222
    %238 = vmatprep.subr.mxu0 0.0
    %239 = vmatpush1.msra.mxu0 %v223
    %240 = vmatprep.subr.mxu0 0.0
    %241 = vmatpush1.msra.mxu0 0.0
    %242 = vmatprep.subr.mxu0 0.0
    %243 = vmatpush1.msra.mxu0 0.0
    %244 = vmatprep.subr.mxu0 0.0
    %245 = vmatpush1.msra.mxu0 0.0
    %246 = vmatprep.subr.mxu0 0.0
    %247 = vmatpush1.msra.mxu0 0.0
    %248 = vmatprep.subr.mxu0 0.0
    %249 = vmatpush1.msra.mxu0 0.0
    %250 = vmatprep.subr.mxu0 0.0
    %251 = vmatpush1.msra.mxu0 0.0
    %252 = vmatprep.subr.mxu0 0.0
    %253 = vmatpush1.msra.mxu0 0.0
    %254 = vmatprep.subr.mxu0 0.0
    %255 = vmatpush1.msra.mxu0 0.0
    %256 = vmatprep.subr.mxu0 0.0
    %257 = vmatpush1.msra.mxu0 0.0
    %258 = vmatprep.subr.mxu0 0.0
    %259 = vmatpush1.msra.mxu0 0.0
    %260 = vmatprep.subr.mxu0 0.0
    %261 = vmatpush1.msra.mxu0 0.0
    %262 = vmatprep.subr.mxu0 0.0
    %263 = vmatpush1.msra.mxu0 0.0
    %264 = vmatprep.subr.mxu0 0.0
    %265 = vmatpush1.msra.mxu0 0.0
    %266 = vmatprep.subr.mxu0 0.0
    %267 = vmatpush1.msra.mxu0 0.0
    %268 = vmatprep.subr.mxu0 0.0
    %269 = vmatpush1.msra.mxu0 0.0
    %270 = vmatprep.subr.mxu0 0.0
    %271 = vmatpush1.msra.mxu0 0.0
    %272 = vmatprep.subr.mxu0 0.0
    %273 = vmatpush1.msra.mxu0 0.0
    %274 = vmatprep.subr.mxu0 0.0
    %275 = vmatpush1.msra.mxu0 0.0
    %276 = vmatprep.subr.mxu0 0.0
    %277 = vmatpush1.msra.mxu0 0.0
    %278 = vmatprep.subr.mxu0 0.0
    %279 = vmatpush1.msra.mxu0 0.0
    %280 = vmatprep.subr.mxu0 0.0
    %281 = vmatpush1.msra.mxu0 0.0
    %282 = vmatprep.subr.mxu0 0.0
    %283 = vmatpush1.msra.mxu0 0.0
    %284 = vmatprep.subr.mxu0 0.0
    %285 = vmatpush1.msra.mxu0 0.0
    %286 = vmatprep.subr.mxu0 0.0
    %287 = vmatpush1.msra.mxu0 0.0
    %288 = vmatprep.subr.mxu0 0.0
    %289 = vmatpush1.msra.mxu0 0.0
    %290 = vmatprep.subr.mxu0 0.0
    %291 = vmatpush1.msra.mxu0 0.0
    %292 = vmatprep.subr.mxu0 0.0
    %293 = vmatpush1.msra.mxu0 0.0
    %294 = vmatprep.subr.mxu0 0.0
    %295 = vmatpush1.msra.mxu0 0.0
    %296 = vmatprep.mubr.f32.mxu0 0.0
    %297 = vmatmul.mubr.f32.gmra.mrb[0].mxu0 %v145
    %v298 = vpop.f32.mrb[0].mxu0
    %v299 = vadd.f32 %v230, %v298
    %v300 = vpop.f32.mrb[0].mxu0
    %301 = vdwg.mxu0
    %302 = vst.msk [vmem:[#allocation3] sm:$0xff] %vm217, %v299
    loop: start=0, step=1, limit=8
    $region94: #{_greedy_search_decode.1} parent=1 // loop_pre_header
      _
    $region95: #{_greedy_search_decode.1} parent=1 // loop_header
      %s304 = sphi 0, %s308
      %p305 = scmp.ge.s32.totalorder %s304, 8
      %v309 = vphi 0.0, %v418
      %v310 = vphi 0.0, %v529
    $region96: #{_greedy_search_decode.1} parent=1 // loop_header_branch
      %307 = sbr.rel (%p305) target = $region100
    $region97: #{_greedy_search_decode.1} parent=1 // loop_body
      %s311 = scalar_lea.vmem [#allocation2], %s304
      %v312 = vld [vmem:[%s311] sm:$0x1]
      %v313 = vld [vmem:[#allocation8] sm:$0xff]
      %v314 = vld [vmem:[#allocation8 + $0x8] sm:$0xff]
      %v315 = vld [vmem:[#allocation8 + $0x10] sm:$0xff]
      %v316 = vld [vmem:[#allocation8 + $0x18] sm:$0xff]
      %v317 = vld [vmem:[%s4] sm:$0x1]
      %319 = vrot.lane.b32.xlu0 %v309, 96
      %v320 = vpop.permute.xlu0 %319
      %v321 = vsel %vm143, %v320, 0
      %323 = vmatprep.subr.mxu0 0.0
      %324 = vmatpush1.msra.mxu0 %v313
      %325 = vmatprep.subr.mxu0 0.0
      %326 = vmatpush1.msra.mxu0 %v314
      %327 = vmatprep.subr.mxu0 0.0
      %328 = vmatpush1.msra.mxu0 %v315
      %329 = vmatprep.subr.mxu0 0.0
      %330 = vmatpush1.msra.mxu0 %v316
      %331 = vmatprep.subr.mxu0 0.0
      %332 = vmatpush1.msra.mxu0 0.0
      %333 = vmatprep.subr.mxu0 0.0
      %334 = vmatpush1.msra.mxu0 0.0
      %335 = vmatprep.subr.mxu0 0.0
      %336 = vmatpush1.msra.mxu0 0.0
      %337 = vmatprep.subr.mxu0 0.0
      %338 = vmatpush1.msra.mxu0 0.0
      %339 = vmatprep.subr.mxu0 0.0
      %340 = vmatpush1.msra.mxu0 0.0
      %341 = vmatprep.subr.mxu0 0.0
      %342 = vmatpush1.msra.mxu0 0.0
      %343 = vmatprep.subr.mxu0 0.0
      %344 = vmatpush1.msra.mxu0 0.0
      %345 = vmatprep.subr.mxu0 0.0
      %346 = vmatpush1.msra.mxu0 0.0
      %347 = vmatprep.subr.mxu0 0.0
      %348 = vmatpush1.msra.mxu0 0.0
      %349 = vmatprep.subr.mxu0 0.0
      %350 = vmatpush1.msra.mxu0 0.0
      %351 = vmatprep.subr.mxu0 0.0
      %352 = vmatpush1.msra.mxu0 0.0
      %353 = vmatprep.subr.mxu0 0.0
      %354 = vmatpush1.msra.mxu0 0.0
      %355 = vmatprep.subr.mxu0 0.0
      %356 = vmatpush1.msra.mxu0 0.0
      %357 = vmatprep.subr.mxu0 0.0
      %358 = vmatpush1.msra.mxu0 0.0
      %359 = vmatprep.subr.mxu0 0.0
      %360 = vmatpush1.msra.mxu0 0.0
      %361 = vmatprep.subr.mxu0 0.0
      %362 = vmatpush1.msra.mxu0 0.0
      %363 = vmatprep.subr.mxu0 0.0
      %364 = vmatpush1.msra.mxu0 0.0
      %365 = vmatprep.subr.mxu0 0.0
      %366 = vmatpush1.msra.mxu0 0.0
      %367 = vmatprep.subr.mxu0 0.0
      %368 = vmatpush1.msra.mxu0 0.0
      %369 = vmatprep.subr.mxu0 0.0
      %370 = vmatpush1.msra.mxu0 0.0
      %371 = vmatprep.subr.mxu0 0.0
      %372 = vmatpush1.msra.mxu0 0.0
      %373 = vmatprep.subr.mxu0 0.0
      %374 = vmatpush1.msra.mxu0 0.0
      %375 = vmatprep.subr.mxu0 0.0
      %376 = vmatpush1.msra.mxu0 0.0
      %377 = vmatprep.subr.mxu0 0.0
      %378 = vmatpush1.msra.mxu0 0.0
      %379 = vmatprep.subr.mxu0 0.0
      %380 = vmatpush1.msra.mxu0 0.0
      %381 = vmatprep.subr.mxu0 0.0
      %382 = vmatpush1.msra.mxu0 0.0
      %383 = vmatprep.subr.mxu0 0.0
      %384 = vmatpush1.msra.mxu0 0.0
      %385 = vmatprep.subr.mxu0 0.0
      %386 = vmatpush1.msra.mxu0 0.0
      %387 = vmatprep.mubr.f32.mxu0 0.0
      %388 = vmatmul.mubr.f32.gmra.mrb[0].mxu0 %v321
      %v389 = vpop.f32.mrb[0].mxu0
      %v390 = vadd.f32 %v317, %v389
      %v391 = vpop.f32.mrb[0].mxu0
      %392 = vdwg.mxu0
      %v393 = vadd.f32 %v312, %v390
      %v394 = vxor.u32 %v393, 2147483648
      %v395 = vmul.f32 %v394, 1.442695
      %v396 = vpow.pop %v395
      %v397 = vadd.f32 %v396, 1.0
      %v398 = vrcp.pop %v397
      %v399 = vmul.f32 1.0, %v398
      %401 = vrot.lane.b32.xlu0 %v390, 64
      %v402 = vpop.permute.xlu0 %401
      %v404 = vmul.f32 %v399, %v402
      %406 = vrot.lane.b32.xlu0 %v404, 64
      %v407 = vpop.permute.xlu0 %406
      %v409 = vadd.f32 %v312, %v407
      %v410 = vtanh.pop %v409
      %v411 = vsub.f32 1.0, %v399
      %413 = vrot.lane.b32.xlu0 %v410, 96
      %v414 = vpop.permute.xlu0 %413
      %v416 = vmul.f32 %v411, %v414
      %v417 = vmul.f32 %v399, %v309
      %v418 = vadd.f32 %v416, %v417
      %s419 = ssub.s32 7, %s304
      %s420 = scalar_lea.vmem [#allocation3], %s419
      %v421 = vld [vmem:[%s420] sm:$0x1]
      %s422 = scalar_lea.vmem [#allocation8], 32
      %v423 = vld [vmem:[%s422] sm:$0xff]
      %v424 = vld [vmem:[%s422 + $0x8] sm:$0xff]
      %v425 = vld [vmem:[%s422 + $0x10] sm:$0xff]
      %v426 = vld [vmem:[%s422 + $0x18] sm:$0xff]
      %s427 = scalar_lea.vmem %s4, 1
      %v428 = vld [vmem:[%s427] sm:$0x1]
      %430 = vrot.lane.b32.xlu0 %v310, 96
      %v431 = vpop.permute.xlu0 %430
      %v432 = vsel %vm143, %v431, 0
      %434 = vmatprep.subr.mxu0 0.0
      %435 = vmatpush1.msra.mxu0 %v423
      %436 = vmatprep.subr.mxu0 0.0
      %437 = vmatpush1.msra.mxu0 %v424
      %438 = vmatprep.subr.mxu0 0.0
      %439 = vmatpush1.msra.mxu0 %v425
      %440 = vmatprep.subr.mxu0 0.0
      %441 = vmatpush1.msra.mxu0 %v426
      %442 = vmatprep.subr.mxu0 0.0
      %443 = vmatpush1.msra.mxu0 0.0
      %444 = vmatprep.subr.mxu0 0.0
      %445 = vmatpush1.msra.mxu0 0.0
      %446 = vmatprep.subr.mxu0 0.0
      %447 = vmatpush1.msra.mxu0 0.0
      %448 = vmatprep.subr.mxu0 0.0
      %449 = vmatpush1.msra.mxu0 0.0
      %450 = vmatprep.subr.mxu0 0.0
      %451 = vmatpush1.msra.mxu0 0.0
      %452 = vmatprep.subr.mxu0 0.0
      %453 = vmatpush1.msra.mxu0 0.0
      %454 = vmatprep.subr.mxu0 0.0
      %455 = vmatpush1.msra.mxu0 0.0
      %456 = vmatprep.subr.mxu0 0.0
      %457 = vmatpush1.msra.mxu0 0.0
      %458 = vmatprep.subr.mxu0 0.0
      %459 = vmatpush1.msra.mxu0 0.0
      %460 = vmatprep.subr.mxu0 0.0
      %461 = vmatpush1.msra.mxu0 0.0
      %462 = vmatprep.subr.mxu0 0.0
      %463 = vmatpush1.msra.mxu0 0.0
      %464 = vmatprep.subr.mxu0 0.0
      %465 = vmatpush1.msra.mxu0 0.0
      %466 = vmatprep.subr.mxu0 0.0
      %467 = vmatpush1.msra.mxu0 0.0
      %468 = vmatprep.subr.mxu0 0.0
      %469 = vmatpush1.msra.mxu0 0.0
      %470 = vmatprep.subr.mxu0 0.0
      %471 = vmatpush1.msra.mxu0 0.0
      %472 = vmatprep.subr.mxu0 0.0
      %473 = vmatpush1.msra.mxu0 0.0
      %474 = vmatprep.subr.mxu0 0.0
      %475 = vmatpush1.msra.mxu0 0.0
      %476 = vmatprep.subr.mxu0 0.0
      %477 = vmatpush1.msra.mxu0 0.0
      %478 = vmatprep.subr.mxu0 0.0
      %479 = vmatpush1.msra.mxu0 0.0
      %480 = vmatprep.subr.mxu0 0.0
      %481 = vmatpush1.msra.mxu0 0.0
      %482 = vmatprep.subr.mxu0 0.0
      %483 = vmatpush1.msra.mxu0 0.0
      %484 = vmatprep.subr.mxu0 0.0
      %485 = vmatpush1.msra.mxu0 0.0
      %486 = vmatprep.subr.mxu0 0.0
      %487 = vmatpush1.msra.mxu0 0.0
      %488 = vmatprep.subr.mxu0 0.0
      %489 = vmatpush1.msra.mxu0 0.0
      %490 = vmatprep.subr.mxu0 0.0
      %491 = vmatpush1.msra.mxu0 0.0
      %492 = vmatprep.subr.mxu0 0.0
      %493 = vmatpush1.msra.mxu0 0.0
      %494 = vmatprep.subr.mxu0 0.0
      %495 = vmatpush1.msra.mxu0 0.0
      %496 = vmatprep.subr.mxu0 0.0
      %497 = vmatpush1.msra.mxu0 0.0
      %498 = vmatprep.mubr.f32.mxu0 0.0
      %499 = vmatmul.mubr.f32.gmra.mrb[0].mxu0 %v432
      %v500 = vpop.f32.mrb[0].mxu0
      %v501 = vadd.f32 %v428, %v500
      %v502 = vpop.f32.mrb[0].mxu0
      %503 = vdwg.mxu0
      %v504 = vadd.f32 %v421, %v501
      %v505 = vxor.u32 %v504, 2147483648
      %v506 = vmul.f32 %v505, 1.442695
      %v507 = vpow.pop %v506
      %v508 = vadd.f32 %v507, 1.0
      %v509 = vrcp.pop %v508
      %v510 = vmul.f32 1.0, %v509
      %512 = vrot.lane.b32.xlu0 %v501, 64
      %v513 = vpop.permute.xlu0 %512
      %v515 = vmul.f32 %v510, %v513
      %517 = vrot.lane.b32.xlu0 %v515, 64
      %v518 = vpop.permute.xlu0 %517
      %v520 = vadd.f32 %v421, %v518
      %v521 = vtanh.pop %v520
      %v522 = vsub.f32 1.0, %v510
      %524 = vrot.lane.b32.xlu0 %v521, 96
      %v525 = vpop.permute.xlu0 %524
      %v527 = vmul.f32 %v522, %v525
      %v528 = vmul.f32 %v510, %v310
      %v529 = vadd.f32 %v527, %v528
      %531 = vrot.lane.b32.xlu0 %v418, 96
      %v532 = vpop.permute.xlu0 %531
      %s534 = scalar_lea.vmem [#allocation4], %s304
      %vm535 = vcmask 253952
      %536 = vst.msk [vmem:[%s534] sm:$0x1] %vm535, %v532
      %538 = vrot.lane.b32.xlu0 %v529, 96
      %v539 = vpop.permute.xlu0 %538
      %s541 = scalar_lea.vmem [#allocation5], %s419
      %542 = vst.msk [vmem:[%s541] sm:$0x1] %vm535, %v539
    $region98: #{_greedy_search_decode.1} parent=1 // loop_footer
      %s308 = sadd.s32 1, %s304
    $region99: #{_greedy_search_decode.1} parent=1 // loop_footer_branch
      %303 = sbr.rel target = $region95
    $region100: #{_greedy_search_decode.1} parent=1 // loop_exit
      _
    %v543 = vld [vmem:[#allocation4] sm:$0xff]
    %v544 = vld [vmem:[#allocation5] sm:$0xff]
    %v545 = vld [vmem:[%s5] sm:$0xff]
    %v546 = vld [vmem:[%s5 + $0x8] sm:$0xff]
    %v547 = vld [vmem:[%s5 + $0x10] sm:$0xff]
    %v548 = vld [vmem:[%s5 + $0x18] sm:$0xff]
    %v549 = vld [vmem:[%s5 + $0x20] sm:$0xff]
    %v550 = vld [vmem:[%s5 + $0x28] sm:$0xff]
    %v551 = vld [vmem:[%s5 + $0x30] sm:$0xff]
    %v552 = vld [vmem:[%s5 + $0x38] sm:$0xff]
    %s553 = scalar_lea.vmem %s5, 64
    %v554 = vld [vmem:[%s553] sm:$0xff]
    %v555 = vld [vmem:[%s553 + $0x8] sm:$0xff]
    %v556 = vld [vmem:[%s553 + $0x10] sm:$0xff]
    %v557 = vld [vmem:[%s553 + $0x18] sm:$0xff]
    %v558 = vld [vmem:[%s553 + $0x20] sm:$0xff]
    %v559 = vld [vmem:[%s553 + $0x28] sm:$0xff]
    %v560 = vld [vmem:[%s553 + $0x30] sm:$0xff]
    %v561 = vld [vmem:[%s553 + $0x38] sm:$0xff]
    %v563 = vsel %vm143, %v544, 0
    %565 = vmatprep.subr.mxu0 0.0
    %566 = vmatpush1.msra.mxu0 %v549
    %567 = vmatprep.subr.mxu0 0.0
    %568 = vmatpush1.msra.mxu0 %v550
    %569 = vmatprep.subr.mxu0 0.0
    %570 = vmatpush1.msra.mxu0 %v551
    %571 = vmatprep.subr.mxu0 0.0
    %572 = vmatpush1.msra.mxu0 %v552
    %573 = vmatprep.subr.mxu0 0.0
    %574 = vmatpush1.msra.mxu0 0.0
    %575 = vmatprep.subr.mxu0 0.0
    %576 = vmatpush1.msra.mxu0 0.0
    %577 = vmatprep.subr.mxu0 0.0
    %578 = vmatpush1.msra.mxu0 0.0
    %579 = vmatprep.subr.mxu0 0.0
    %580 = vmatpush1.msra.mxu0 0.0
    %581 = vmatprep.subr.mxu0 0.0
    %582 = vmatpush1.msra.mxu0 0.0
    %583 = vmatprep.subr.mxu0 0.0
    %584 = vmatpush1.msra.mxu0 0.0
    %585 = vmatprep.subr.mxu0 0.0
    %586 = vmatpush1.msra.mxu0 0.0
    %587 = vmatprep.subr.mxu0 0.0
    %588 = vmatpush1.msra.mxu0 0.0
    %589 = vmatprep.subr.mxu0 0.0
    %590 = vmatpush1.msra.mxu0 0.0
    %591 = vmatprep.subr.mxu0 0.0
    %592 = vmatpush1.msra.mxu0 0.0
    %593 = vmatprep.subr.mxu0 0.0
    %594 = vmatpush1.msra.mxu0 0.0
    %595 = vmatprep.subr.mxu0 0.0
    %596 = vmatpush1.msra.mxu0 0.0
    %597 = vmatprep.subr.mxu0 0.0
    %598 = vmatpush1.msra.mxu0 0.0
    %599 = vmatprep.subr.mxu0 0.0
    %600 = vmatpush1.msra.mxu0 0.0
    %601 = vmatprep.subr.mxu0 0.0
    %602 = vmatpush1.msra.mxu0 0.0
    %603 = vmatprep.subr.mxu0 0.0
    %604 = vmatpush1.msra.mxu0 0.0
    %605 = vmatprep.subr.mxu0 0.0
    %606 = vmatpush1.msra.mxu0 0.0
    %607 = vmatprep.subr.mxu0 0.0
    %608 = vmatpush1.msra.mxu0 0.0
    %609 = vmatprep.subr.mxu0 0.0
    %610 = vmatpush1.msra.mxu0 0.0
    %611 = vmatprep.subr.mxu0 0.0
    %612 = vmatpush1.msra.mxu0 0.0
    %613 = vmatprep.subr.mxu0 0.0
    %614 = vmatpush1.msra.mxu0 0.0
    %615 = vmatprep.subr.mxu0 0.0
    %616 = vmatpush1.msra.mxu0 0.0
    %617 = vmatprep.subr.mxu0 0.0
    %618 = vmatpush1.msra.mxu0 0.0
    %619 = vmatprep.subr.mxu0 0.0
    %620 = vmatpush1.msra.mxu0 0.0
    %621 = vmatprep.subr.mxu0 0.0
    %622 = vmatpush1.msra.mxu0 0.0
    %623 = vmatprep.subr.mxu0 0.0
    %624 = vmatpush1.msra.mxu0 0.0
    %625 = vmatprep.subr.mxu0 0.0
    %626 = vmatpush1.msra.mxu0 0.0
    %627 = vmatprep.subr.mxu0 0.0
    %628 = vmatpush1.msra.mxu0 0.0
    %629 = vmatprep.mubr.f32.mxu0 0.0
    %630 = vmatmul.mubr.f32.gmra.mrb[0].mxu0 %v563
    %v631 = vpop.f32.mrb[0].mxu0
    %v632 = vadd.f32 0.0, %v631
    %v633 = vpop.f32.mrb[0].mxu0
    %634 = vdwg.mxu0
    %v636 = vsel %vm143, %v543, 0
    %638 = vmatprep.subr.mxu0 0.0
    %639 = vmatpush1.msra.mxu0 %v545
    %640 = vmatprep.subr.mxu0 0.0
    %641 = vmatpush1.msra.mxu0 %v546
    %642 = vmatprep.subr.mxu0 0.0
    %643 = vmatpush1.msra.mxu0 %v547
    %644 = vmatprep.subr.mxu0 0.0
    %645 = vmatpush1.msra.mxu0 %v548
    %646 = vmatprep.subr.mxu0 0.0
    %647 = vmatpush1.msra.mxu0 0.0
    %648 = vmatprep.subr.mxu0 0.0
    %649 = vmatpush1.msra.mxu0 0.0
    %650 = vmatprep.subr.mxu0 0.0
    %651 = vmatpush1.msra.mxu0 0.0
    %652 = vmatprep.subr.mxu0 0.0
    %653 = vmatpush1.msra.mxu0 0.0
    %654 = vmatprep.subr.mxu0 0.0
    %655 = vmatpush1.msra.mxu0 0.0
    %656 = vmatprep.subr.mxu0 0.0
    %657 = vmatpush1.msra.mxu0 0.0
    %658 = vmatprep.subr.mxu0 0.0
    %659 = vmatpush1.msra.mxu0 0.0
    %660 = vmatprep.subr.mxu0 0.0
    %661 = vmatpush1.msra.mxu0 0.0
    %662 = vmatprep.subr.mxu0 0.0
    %663 = vmatpush1.msra.mxu0 0.0
    %664 = vmatprep.subr.mxu0 0.0
    %665 = vmatpush1.msra.mxu0 0.0
    %666 = vmatprep.subr.mxu0 0.0
    %667 = vmatpush1.msra.mxu0 0.0
    %668 = vmatprep.subr.mxu0 0.0
    %669 = vmatpush1.msra.mxu0 0.0
    %670 = vmatprep.subr.mxu0 0.0
    %671 = vmatpush1.msra.mxu0 0.0
    %672 = vmatprep.subr.mxu0 0.0
    %673 = vmatpush1.msra.mxu0 0.0
    %674 = vmatprep.subr.mxu0 0.0
    %675 = vmatpush1.msra.mxu0 0.0
    %676 = vmatprep.subr.mxu0 0.0
    %677 = vmatpush1.msra.mxu0 0.0
    %678 = vmatprep.subr.mxu0 0.0
    %679 = vmatpush1.msra.mxu0 0.0
    %680 = vmatprep.subr.mxu0 0.0
    %681 = vmatpush1.msra.mxu0 0.0
    %682 = vmatprep.subr.mxu0 0.0
    %683 = vmatpush1.msra.mxu0 0.0
    %684 = vmatprep.subr.mxu0 0.0
    %685 = vmatpush1.msra.mxu0 0.0
    %686 = vmatprep.subr.mxu0 0.0
    %687 = vmatpush1.msra.mxu0 0.0
    %688 = vmatprep.subr.mxu0 0.0
    %689 = vmatpush1.msra.mxu0 0.0
    %690 = vmatprep.subr.mxu0 0.0
    %691 = vmatpush1.msra.mxu0 0.0
    %692 = vmatprep.subr.mxu0 0.0
    %693 = vmatpush1.msra.mxu0 0.0
    %694 = vmatprep.subr.mxu0 0.0
    %695 = vmatpush1.msra.mxu0 0.0
    %696 = vmatprep.subr.mxu0 0.0
    %697 = vmatpush1.msra.mxu0 0.0
    %698 = vmatprep.subr.mxu0 0.0
    %699 = vmatpush1.msra.mxu0 0.0
    %700 = vmatprep.subr.mxu0 0.0
    %701 = vmatpush1.msra.mxu0 0.0
    %702 = vmatprep.mubr.f32.mxu0 0.0
    %703 = vmatmul.mubr.f32.gmra.mrb[0].mxu0 %v636
    %v704 = vpop.f32.mrb[0].mxu0
    %v705 = vadd.f32 %v632, %v704
    %v706 = vpop.f32.mrb[0].mxu0
    %707 = vdwg.mxu0
    %v708 = vld [vmem:[%s7] sm:$0x1]
    %v710 = vlaneseq
    %v711 = vshrl.u32 %v710, 7
    %v712 = vsub.s32 0, %v711
    %v713 = vrot.slane %v708, %v712
    %v715 = vadd.f32 %v705, %v713
    %716 = vst.msk [vmem:[#allocation2] sm:$0xff] %vm217, %v715
    %717 = vmatprep.subr.mxu0 0.0
    %718 = vmatpush1.msra.mxu0 %v558
    %719 = vmatprep.subr.mxu0 0.0
    %720 = vmatpush1.msra.mxu0 %v559
    %721 = vmatprep.subr.mxu0 0.0
    %722 = vmatpush1.msra.mxu0 %v560
    %723 = vmatprep.subr.mxu0 0.0
    %724 = vmatpush1.msra.mxu0 %v561
    %725 = vmatprep.subr.mxu0 0.0
    %726 = vmatpush1.msra.mxu0 0.0
    %727 = vmatprep.subr.mxu0 0.0
    %728 = vmatpush1.msra.mxu0 0.0
    %729 = vmatprep.subr.mxu0 0.0
    %730 = vmatpush1.msra.mxu0 0.0
    %731 = vmatprep.subr.mxu0 0.0
    %732 = vmatpush1.msra.mxu0 0.0
    %733 = vmatprep.subr.mxu0 0.0
    %734 = vmatpush1.msra.mxu0 0.0
    %735 = vmatprep.subr.mxu0 0.0
    %736 = vmatpush1.msra.mxu0 0.0
    %737 = vmatprep.subr.mxu0 0.0
    %738 = vmatpush1.msra.mxu0 0.0
    %739 = vmatprep.subr.mxu0 0.0
    %740 = vmatpush1.msra.mxu0 0.0
    %741 = vmatprep.subr.mxu0 0.0
    %742 = vmatpush1.msra.mxu0 0.0
    %743 = vmatprep.subr.mxu0 0.0
    %744 = vmatpush1.msra.mxu0 0.0
    %745 = vmatprep.subr.mxu0 0.0
    %746 = vmatpush1.msra.mxu0 0.0
    %747 = vmatprep.subr.mxu0 0.0
    %748 = vmatpush1.msra.mxu0 0.0
    %749 = vmatprep.subr.mxu0 0.0
    %750 = vmatpush1.msra.mxu0 0.0
    %751 = vmatprep.subr.mxu0 0.0
    %752 = vmatpush1.msra.mxu0 0.0
    %753 = vmatprep.subr.mxu0 0.0
    %754 = vmatpush1.msra.mxu0 0.0
    %755 = vmatprep.subr.mxu0 0.0
    %756 = vmatpush1.msra.mxu0 0.0
    %757 = vmatprep.subr.mxu0 0.0
    %758 = vmatpush1.msra.mxu0 0.0
    %759 = vmatprep.subr.mxu0 0.0
    %760 = vmatpush1.msra.mxu0 0.0
    %761 = vmatprep.subr.mxu0 0.0
    %762 = vmatpush1.msra.mxu0 0.0
    %763 = vmatprep.subr.mxu0 0.0
    %764 = vmatpush1.msra.mxu0 0.0
    %765 = vmatprep.subr.mxu0 0.0
    %766 = vmatpush1.msra.mxu0 0.0
    %767 = vmatprep.subr.mxu0 0.0
    %768 = vmatpush1.msra.mxu0 0.0
    %769 = vmatprep.subr.mxu0 0.0
    %770 = vmatpush1.msra.mxu0 0.0
    %771 = vmatprep.subr.mxu0 0.0
    %772 = vmatpush1.msra.mxu0 0.0
    %773 = vmatprep.subr.mxu0 0.0
    %774 = vmatpush1.msra.mxu0 0.0
    %775 = vmatprep.subr.mxu0 0.0
    %776 = vmatpush1.msra.mxu0 0.0
    %777 = vmatprep.subr.mxu0 0.0
    %778 = vmatpush1.msra.mxu0 0.0
    %779 = vmatprep.subr.mxu0 0.0
    %780 = vmatpush1.msra.mxu0 0.0
    %781 = vmatprep.mubr.f32.mxu0 0.0
    %782 = vmatmul.mubr.f32.gmra.mrb[0].mxu0 %v563
    %v783 = vpop.f32.mrb[0].mxu0
    %v784 = vadd.f32 0.0, %v783
    %v785 = vpop.f32.mrb[0].mxu0
    %786 = vdwg.mxu0
    %787 = vmatprep.subr.mxu0 0.0
    %788 = vmatpush1.msra.mxu0 %v554
    %789 = vmatprep.subr.mxu0 0.0
    %790 = vmatpush1.msra.mxu0 %v555
    %791 = vmatprep.subr.mxu0 0.0
    %792 = vmatpush1.msra.mxu0 %v556
    %793 = vmatprep.subr.mxu0 0.0
    %794 = vmatpush1.msra.mxu0 %v557
    %795 = vmatprep.subr.mxu0 0.0
    %796 = vmatpush1.msra.mxu0 0.0
    %797 = vmatprep.subr.mxu0 0.0
    %798 = vmatpush1.msra.mxu0 0.0
    %799 = vmatprep.subr.mxu0 0.0
    %800 = vmatpush1.msra.mxu0 0.0
    %801 = vmatprep.subr.mxu0 0.0
    %802 = vmatpush1.msra.mxu0 0.0
    %803 = vmatprep.subr.mxu0 0.0
    %804 = vmatpush1.msra.mxu0 0.0
    %805 = vmatprep.subr.mxu0 0.0
    %806 = vmatpush1.msra.mxu0 0.0
    %807 = vmatprep.subr.mxu0 0.0
    %808 = vmatpush1.msra.mxu0 0.0
    %809 = vmatprep.subr.mxu0 0.0
    %810 = vmatpush1.msra.mxu0 0.0
    %811 = vmatprep.subr.mxu0 0.0
    %812 = vmatpush1.msra.mxu0 0.0
    %813 = vmatprep.subr.mxu0 0.0
    %814 = vmatpush1.msra.mxu0 0.0
    %815 = vmatprep.subr.mxu0 0.0
    %816 = vmatpush1.msra.mxu0 0.0
    %817 = vmatprep.subr.mxu0 0.0
    %818 = vmatpush1.msra.mxu0 0.0
    %819 = vmatprep.subr.mxu0 0.0
    %820 = vmatpush1.msra.mxu0 0.0
    %821 = vmatprep.subr.mxu0 0.0
    %822 = vmatpush1.msra.mxu0 0.0
    %823 = vmatprep.subr.mxu0 0.0
    %824 = vmatpush1.msra.mxu0 0.0
    %825 = vmatprep.subr.mxu0 0.0
    %826 = vmatpush1.msra.mxu0 0.0
    %827 = vmatprep.subr.mxu0 0.0
    %828 = vmatpush1.msra.mxu0 0.0
    %829 = vmatprep.subr.mxu0 0.0
    %830 = vmatpush1.msra.mxu0 0.0
    %831 = vmatprep.subr.mxu0 0.0
    %832 = vmatpush1.msra.mxu0 0.0
    %833 = vmatprep.subr.mxu0 0.0
    %834 = vmatpush1.msra.mxu0 0.0
    %835 = vmatprep.subr.mxu0 0.0
    %836 = vmatpush1.msra.mxu0 0.0
    %837 = vmatprep.subr.mxu0 0.0
    %838 = vmatpush1.msra.mxu0 0.0
    %839 = vmatprep.subr.mxu0 0.0
    %840 = vmatpush1.msra.mxu0 0.0
    %841 = vmatprep.subr.mxu0 0.0
    %842 = vmatpush1.msra.mxu0 0.0
    %843 = vmatprep.subr.mxu0 0.0
    %844 = vmatpush1.msra.mxu0 0.0
    %845 = vmatprep.subr.mxu0 0.0
    %846 = vmatpush1.msra.mxu0 0.0
    %847 = vmatprep.subr.mxu0 0.0
    %848 = vmatpush1.msra.mxu0 0.0
    %849 = vmatprep.subr.mxu0 0.0
    %850 = vmatpush1.msra.mxu0 0.0
    %851 = vmatprep.mubr.f32.mxu0 0.0
    %852 = vmatmul.mubr.f32.gmra.mrb[0].mxu0 %v636
    %v853 = vpop.f32.mrb[0].mxu0
    %v854 = vadd.f32 %v784, %v853
    %v855 = vpop.f32.mrb[0].mxu0
    %856 = vdwg.mxu0
    %s857 = scalar_lea.vmem %s7, 1
    %v858 = vld [vmem:[%s857] sm:$0x1]
    %v860 = vlaneseq
    %v861 = vshrl.u32 %v860, 7
    %v862 = vsub.s32 0, %v861
    %v863 = vrot.slane %v858, %v862
    %v865 = vadd.f32 %v854, %v863
    %866 = vst.msk [vmem:[#allocation3] sm:$0xff] %vm217, %v865
    loop: start=0, step=1, limit=8
    $region101: #{_greedy_search_decode.1} parent=1 // loop_pre_header
      _
    $region102: #{_greedy_search_decode.1} parent=1 // loop_header
      %s868 = sphi 0, %s872
      %p869 = scmp.ge.s32.totalorder %s868, 8
      %v873 = vphi 0.0, %v982
      %v874 = vphi 0.0, %v1093
    $region103: #{_greedy_search_decode.1} parent=1 // loop_header_branch
      %871 = sbr.rel (%p869) target = $region107
    $region104: #{_greedy_search_decode.1} parent=1 // loop_body
      %s875 = scalar_lea.vmem [#allocation2], %s868
      %v876 = vld [vmem:[%s875] sm:$0x1]
      %v877 = vld [vmem:[#allocation11] sm:$0xff]
      %v878 = vld [vmem:[#allocation11 + $0x8] sm:$0xff]
      %v879 = vld [vmem:[#allocation11 + $0x10] sm:$0xff]
      %v880 = vld [vmem:[#allocation11 + $0x18] sm:$0xff]
      %v881 = vld [vmem:[%s8] sm:$0x1]
      %883 = vrot.lane.b32.xlu0 %v873, 96
      %v884 = vpop.permute.xlu0 %883
      %v885 = vsel %vm143, %v884, 0
      %887 = vmatprep.subr.mxu0 0.0
      %888 = vmatpush1.msra.mxu0 %v877
      %889 = vmatprep.subr.mxu0 0.0
      %890 = vmatpush1.msra.mxu0 %v878
      %891 = vmatprep.subr.mxu0 0.0
      %892 = vmatpush1.msra.mxu0 %v879
      %893 = vmatprep.subr.mxu0 0.0
      %894 = vmatpush1.msra.mxu0 %v880
      %895 = vmatprep.subr.mxu0 0.0
      %896 = vmatpush1.msra.mxu0 0.0
      %897 = vmatprep.subr.mxu0 0.0
      %898 = vmatpush1.msra.mxu0 0.0
      %899 = vmatprep.subr.mxu0 0.0
      %900 = vmatpush1.msra.mxu0 0.0
      %901 = vmatprep.subr.mxu0 0.0
      %902 = vmatpush1.msra.mxu0 0.0
      %903 = vmatprep.subr.mxu0 0.0
      %904 = vmatpush1.msra.mxu0 0.0
      %905 = vmatprep.subr.mxu0 0.0
      %906 = vmatpush1.msra.mxu0 0.0
      %907 = vmatprep.subr.mxu0 0.0
      %908 = vmatpush1.msra.mxu0 0.0
      %909 = vmatprep.subr.mxu0 0.0
      %910 = vmatpush1.msra.mxu0 0.0
      %911 = vmatprep.subr.mxu0 0.0
      %912 = vmatpush1.msra.mxu0 0.0
      %913 = vmatprep.subr.mxu0 0.0
      %914 = vmatpush1.msra.mxu0 0.0
      %915 = vmatprep.subr.mxu0 0.0
      %916 = vmatpush1.msra.mxu0 0.0
      %917 = vmatprep.subr.mxu0 0.0
      %918 = vmatpush1.msra.mxu0 0.0
      %919 = vmatprep.subr.mxu0 0.0
      %920 = vmatpush1.msra.mxu0 0.0
      %921 = vmatprep.subr.mxu0 0.0
      %922 = vmatpush1.msra.mxu0 0.0
      %923 = vmatprep.subr.mxu0 0.0
      %924 = vmatpush1.msra.mxu0 0.0
      %925 = vmatprep.subr.mxu0 0.0
      %926 = vmatpush1.msra.mxu0 0.0
      %927 = vmatprep.subr.mxu0 0.0
      %928 = vmatpush1.msra.mxu0 0.0
      %929 = vmatprep.subr.mxu0 0.0
      %930 = vmatpush1.msra.mxu0 0.0
      %931 = vmatprep.subr.mxu0 0.0
      %932 = vmatpush1.msra.mxu0 0.0
      %933 = vmatprep.subr.mxu0 0.0
      %934 = vmatpush1.msra.mxu0 0.0
      %935 = vmatprep.subr.mxu0 0.0
      %936 = vmatpush1.msra.mxu0 0.0
      %937 = vmatprep.subr.mxu0 0.0
      %938 = vmatpush1.msra.mxu0 0.0
      %939 = vmatprep.subr.mxu0 0.0
      %940 = vmatpush1.msra.mxu0 0.0
      %941 = vmatprep.subr.mxu0 0.0
      %942 = vmatpush1.msra.mxu0 0.0
      %943 = vmatprep.subr.mxu0 0.0
      %944 = vmatpush1.msra.mxu0 0.0
      %945 = vmatprep.subr.mxu0 0.0
      %946 = vmatpush1.msra.mxu0 0.0
      %947 = vmatprep.subr.mxu0 0.0
      %948 = vmatpush1.msra.mxu0 0.0
      %949 = vmatprep.subr.mxu0 0.0
      %950 = vmatpush1.msra.mxu0 0.0
      %951 = vmatprep.mubr.f32.mxu0 0.0
      %952 = vmatmul.mubr.f32.gmra.mrb[0].mxu0 %v885
      %v953 = vpop.f32.mrb[0].mxu0
      %v954 = vadd.f32 %v881, %v953
      %v955 = vpop.f32.mrb[0].mxu0
      %956 = vdwg.mxu0
      %v957 = vadd.f32 %v876, %v954
      %v958 = vxor.u32 %v957, 2147483648
      %v959 = vmul.f32 %v958, 1.442695
      %v960 = vpow.pop %v959
      %v961 = vadd.f32 %v960, 1.0
      %v962 = vrcp.pop %v961
      %v963 = vmul.f32 1.0, %v962
      %965 = vrot.lane.b32.xlu0 %v954, 64
      %v966 = vpop.permute.xlu0 %965
      %v968 = vmul.f32 %v963, %v966
      %970 = vrot.lane.b32.xlu0 %v968, 64
      %v971 = vpop.permute.xlu0 %970
      %v973 = vadd.f32 %v876, %v971
      %v974 = vtanh.pop %v973
      %v975 = vsub.f32 1.0, %v963
      %977 = vrot.lane.b32.xlu0 %v974, 96
      %v978 = vpop.permute.xlu0 %977
      %v980 = vmul.f32 %v975, %v978
      %v981 = vmul.f32 %v963, %v873
      %v982 = vadd.f32 %v980, %v981
      %s983 = ssub.s32 7, %s868
      %s984 = scalar_lea.vmem [#allocation3], %s983
      %v985 = vld [vmem:[%s984] sm:$0x1]
      %s986 = scalar_lea.vmem [#allocation11], 32
      %v987 = vld [vmem:[%s986] sm:$0xff]
      %v988 = vld [vmem:[%s986 + $0x8] sm:$0xff]
      %v989 = vld [vmem:[%s986 + $0x10] sm:$0xff]
      %v990 = vld [vmem:[%s986 + $0x18] sm:$0xff]
      %s991 = scalar_lea.vmem %s8, 1
      %v992 = vld [vmem:[%s991] sm:$0x1]
      %994 = vrot.lane.b32.xlu0 %v874, 96
      %v995 = vpop.permute.xlu0 %994
      %v996 = vsel %vm143, %v995, 0
      %998 = vmatprep.subr.mxu0 0.0
      %999 = vmatpush1.msra.mxu0 %v987
      %1000 = vmatprep.subr.mxu0 0.0
      %1001 = vmatpush1.msra.mxu0 %v988
      %1002 = vmatprep.subr.mxu0 0.0
      %1003 = vmatpush1.msra.mxu0 %v989
      %1004 = vmatprep.subr.mxu0 0.0
      %1005 = vmatpush1.msra.mxu0 %v990
      %1006 = vmatprep.subr.mxu0 0.0
      %1007 = vmatpush1.msra.mxu0 0.0
      %1008 = vmatprep.subr.mxu0 0.0
      %1009 = vmatpush1.msra.mxu0 0.0
      %1010 = vmatprep.subr.mxu0 0.0
      %1011 = vmatpush1.msra.mxu0 0.0
      %1012 = vmatprep.subr.mxu0 0.0
      %1013 = vmatpush1.msra.mxu0 0.0
      %1014 = vmatprep.subr.mxu0 0.0
      %1015 = vmatpush1.msra.mxu0 0.0
      %1016 = vmatprep.subr.mxu0 0.0
      %1017 = vmatpush1.msra.mxu0 0.0
      %1018 = vmatprep.subr.mxu0 0.0
      %1019 = vmatpush1.msra.mxu0 0.0
      %1020 = vmatprep.subr.mxu0 0.0
      %1021 = vmatpush1.msra.mxu0 0.0
      %1022 = vmatprep.subr.mxu0 0.0
      %1023 = vmatpush1.msra.mxu0 0.0
      %1024 = vmatprep.subr.mxu0 0.0
      %1025 = vmatpush1.msra.mxu0 0.0
      %1026 = vmatprep.subr.mxu0 0.0
      %1027 = vmatpush1.msra.mxu0 0.0
      %1028 = vmatprep.subr.mxu0 0.0
      %1029 = vmatpush1.msra.mxu0 0.0
      %1030 = vmatprep.subr.mxu0 0.0
      %1031 = vmatpush1.msra.mxu0 0.0
      %1032 = vmatprep.subr.mxu0 0.0
      %1033 = vmatpush1.msra.mxu0 0.0
      %1034 = vmatprep.subr.mxu0 0.0
      %1035 = vmatpush1.msra.mxu0 0.0
      %1036 = vmatprep.subr.mxu0 0.0
      %1037 = vmatpush1.msra.mxu0 0.0
      %1038 = vmatprep.subr.mxu0 0.0
      %1039 = vmatpush1.msra.mxu0 0.0
      %1040 = vmatprep.subr.mxu0 0.0
      %1041 = vmatpush1.msra.mxu0 0.0
      %1042 = vmatprep.subr.mxu0 0.0
      %1043 = vmatpush1.msra.mxu0 0.0
      %1044 = vmatprep.subr.mxu0 0.0
      %1045 = vmatpush1.msra.mxu0 0.0
      %1046 = vmatprep.subr.mxu0 0.0
      %1047 = vmatpush1.msra.mxu0 0.0
      %1048 = vmatprep.subr.mxu0 0.0
      %1049 = vmatpush1.msra.mxu0 0.0
      %1050 = vmatprep.subr.mxu0 0.0
      %1051 = vmatpush1.msra.mxu0 0.0
      %1052 = vmatprep.subr.mxu0 0.0
      %1053 = vmatpush1.msra.mxu0 0.0
      %1054 = vmatprep.subr.mxu0 0.0
      %1055 = vmatpush1.msra.mxu0 0.0
      %1056 = vmatprep.subr.mxu0 0.0
      %1057 = vmatpush1.msra.mxu0 0.0
      %1058 = vmatprep.subr.mxu0 0.0
      %1059 = vmatpush1.msra.mxu0 0.0
      %1060 = vmatprep.subr.mxu0 0.0
      %1061 = vmatpush1.msra.mxu0 0.0
      %1062 = vmatprep.mubr.f32.mxu0 0.0
      %1063 = vmatmul.mubr.f32.gmra.mrb[0].mxu0 %v996
      %v1064 = vpop.f32.mrb[0].mxu0
      %v1065 = vadd.f32 %v992, %v1064
      %v1066 = vpop.f32.mrb[0].mxu0
      %1067 = vdwg.mxu0
      %v1068 = vadd.f32 %v985, %v1065
      %v1069 = vxor.u32 %v1068, 2147483648
      %v1070 = vmul.f32 %v1069, 1.442695
      %v1071 = vpow.pop %v1070
      %v1072 = vadd.f32 %v1071, 1.0
      %v1073 = vrcp.pop %v1072
      %v1074 = vmul.f32 1.0, %v1073
      %1076 = vrot.lane.b32.xlu0 %v1065, 64
      %v1077 = vpop.permute.xlu0 %1076
      %v1079 = vmul.f32 %v1074, %v1077
      %1081 = vrot.lane.b32.xlu0 %v1079, 64
      %v1082 = vpop.permute.xlu0 %1081
      %v1084 = vadd.f32 %v985, %v1082
      %v1085 = vtanh.pop %v1084
      %v1086 = vsub.f32 1.0, %v1074
      %1088 = vrot.lane.b32.xlu0 %v1085, 96
      %v1089 = vpop.permute.xlu0 %1088
      %v1091 = vmul.f32 %v1086, %v1089
      %v1092 = vmul.f32 %v1074, %v874
      %v1093 = vadd.f32 %v1091, %v1092
      %1095 = vrot.lane.b32.xlu0 %v982, 96
      %v1096 = vpop.permute.xlu0 %1095
      %s1098 = scalar_lea.vmem [#allocation6], %s868
      %vm1099 = vcmask 253952
      %1100 = vst.msk [vmem:[%s1098] sm:$0x1] %vm1099, %v1096
      %1102 = vrot.lane.b32.xlu0 %v1093, 96
      %v1103 = vpop.permute.xlu0 %1102
      %s1105 = scalar_lea.vmem [#allocation7], %s983
      %1106 = vst.msk [vmem:[%s1105] sm:$0x1] %vm1099, %v1103
    $region105: #{_greedy_search_decode.1} parent=1 // loop_footer
      %s872 = sadd.s32 1, %s868
    $region106: #{_greedy_search_decode.1} parent=1 // loop_footer_branch
      %867 = sbr.rel target = $region102
    $region107: #{_greedy_search_decode.1} parent=1 // loop_exit
      _
    %v1107 = vld [vmem:[#allocation6] sm:$0xff]
    %v1108 = vld [vmem:[#allocation7] sm:$0xff]
    %v1109 = vadd.f32 %v1107, %v1108
    %v1110 = vlaneseq
    %v1111 = vand.u32 %v1110, 127
    loop: start=0, step=1, limit=6
    $region108: #{_greedy_search_decode.1} parent=1 // loop_pre_header
      _
    $region109: #{_greedy_search_decode.1} parent=1 // loop_header
      %s1113 = sphi 0, %s1117
      %p1114 = scmp.ge.s32.totalorder %s1113, 6
      %v1118 = vphi 1, %v2006
      %v1119 = vphi %v309, %v1391
      %v1120 = vphi %v310, %v1581
      %v1121 = vphi 0, %v2009
      %v1122 = vphi 0.0, %v2010
    $region110: #{_greedy_search_decode.1} parent=1 // loop_header_branch
      %1116 = sbr.rel (%p1114) target = $region114
    $region111: #{_greedy_search_decode.1} parent=1 // loop_body
      %vm1123 = vcmp.eq.s32.totalorder %v1111, %v1118
      %v1124 = vsel %vm1123, 1, 0
      %v1125 = vcvt.s32.f32 %v1124
      %v1126 = vld [vmem:[%s9] sm:$0xff]
      %v1127 = vld [vmem:[%s9 + $0x8] sm:$0xff]
      %v1128 = vld [vmem:[%s9 + $0x10] sm:$0xff]
      %v1129 = vld [vmem:[%s9 + $0x18] sm:$0xff]
      %v1130 = vld [vmem:[%s9 + $0x20] sm:$0xff]
      %v1131 = vld [vmem:[%s9 + $0x28] sm:$0xff]
      %v1132 = vld [vmem:[%s9 + $0x30] sm:$0xff]
      %v1133 = vld [vmem:[%s9 + $0x38] sm:$0xff]
      %vm1134 = vcmask 523264
      %v1136 = vsel %vm1134, %v1125, 0
      %1138 = vmatprep.subr.mxu0 0.0
      %1139 = vmatpush1.msra.mxu0 %v1126
      %1140 = vmatprep.subr.mxu0 0.0
      %1141 = vmatpush1.msra.mxu0 %v1127
      %1142 = vmatprep.subr.mxu0 0.0
      %1143 = vmatpush1.msra.mxu0 %v1128
      %1144 = vmatprep.subr.mxu0 0.0
      %1145 = vmatpush1.msra.mxu0 %v1129
      %1146 = vmatprep.subr.mxu0 0.0
      %1147 = vmatpush1.msra.mxu0 %v1130
      %1148 = vmatprep.subr.mxu0 0.0
      %1149 = vmatpush1.msra.mxu0 %v1131
      %1150 = vmatprep.subr.mxu0 0.0
      %1151 = vmatpush1.msra.mxu0 %v1132
      %1152 = vmatprep.subr.mxu0 0.0
      %1153 = vmatpush1.msra.mxu0 %v1133
      %1154 = vmatprep.subr.mxu0 0.0
      %1155 = vmatpush1.msra.mxu0 0.0
      %1156 = vmatprep.subr.mxu0 0.0
      %1157 = vmatpush1.msra.mxu0 0.0
      %1158 = vmatprep.subr.mxu0 0.0
      %1159 = vmatpush1.msra.mxu0 0.0
      %1160 = vmatprep.subr.mxu0 0.0
      %1161 = vmatpush1.msra.mxu0 0.0
      %1162 = vmatprep.subr.mxu0 0.0
      %1163 = vmatpush1.msra.mxu0 0.0
      %1164 = vmatprep.subr.mxu0 0.0
      %1165 = vmatpush1.msra.mxu0 0.0
      %1166 = vmatprep.subr.mxu0 0.0
      %1167 = vmatpush1.msra.mxu0 0.0
      %1168 = vmatprep.subr.mxu0 0.0
      %1169 = vmatpush1.msra.mxu0 0.0
      %1170 = vmatprep.subr.mxu0 0.0
      %1171 = vmatpush1.msra.mxu0 0.0
      %1172 = vmatprep.subr.mxu0 0.0
      %1173 = vmatpush1.msra.mxu0 0.0
      %1174 = vmatprep.subr.mxu0 0.0
      %1175 = vmatpush1.msra.mxu0 0.0
      %1176 = vmatprep.subr.mxu0 0.0
      %1177 = vmatpush1.msra.mxu0 0.0
      %1178 = vmatprep.subr.mxu0 0.0
      %1179 = vmatpush1.msra.mxu0 0.0
      %1180 = vmatprep.subr.mxu0 0.0
      %1181 = vmatpush1.msra.mxu0 0.0
      %1182 = vmatprep.subr.mxu0 0.0
      %1183 = vmatpush1.msra.mxu0 0.0
      %1184 = vmatprep.subr.mxu0 0.0
      %1185 = vmatpush1.msra.mxu0 0.0
      %1186 = vmatprep.subr.mxu0 0.0
      %1187 = vmatpush1.msra.mxu0 0.0
      %1188 = vmatprep.subr.mxu0 0.0
      %1189 = vmatpush1.msra.mxu0 0.0
      %1190 = vmatprep.subr.mxu0 0.0
      %1191 = vmatpush1.msra.mxu0 0.0
      %1192 = vmatprep.subr.mxu0 0.0
      %1193 = vmatpush1.msra.mxu0 0.0
      %1194 = vmatprep.subr.mxu0 0.0
      %1195 = vmatpush1.msra.mxu0 0.0
      %1196 = vmatprep.subr.mxu0 0.0
      %1197 = vmatpush1.msra.mxu0 0.0
      %1198 = vmatprep.subr.mxu0 0.0
      %1199 = vmatpush1.msra.mxu0 0.0
      %1200 = vmatprep.subr.mxu0 0.0
      %1201 = vmatpush1.msra.mxu0 0.0
      %1202 = vmatprep.mubr.f32.mxu0 0.0
      %1203 = vmatmul.mubr.f32.gmra.mrb[0].mxu0 %v1136
      %v1204 = vpop.f32.mrb[0].mxu0
      %v1205 = vadd.f32 0.0, %v1204
      %v1206 = vpop.f32.mrb[0].mxu0
      %1207 = vdwg.mxu0
      %v1208 = vld [vmem:[#allocation13] sm:$0xff]
      %v1209 = vld [vmem:[#allocation13 + $0x8] sm:$0xff]
      %v1210 = vld [vmem:[#allocation13 + $0x10] sm:$0xff]
      %v1211 = vld [vmem:[#allocation13 + $0x18] sm:$0xff]
      %v1212 = vld [vmem:[%s12] sm:$0x1]
      %v1214 = vsel %vm143, %v1205, 0
      %1216 = vmatprep.subr.mxu0 0.0
      %1217 = vmatpush1.msra.mxu0 %v1208
      %1218 = vmatprep.subr.mxu0 0.0
      %1219 = vmatpush1.msra.mxu0 %v1209
      %1220 = vmatprep.subr.mxu0 0.0
      %1221 = vmatpush1.msra.mxu0 %v1210
      %1222 = vmatprep.subr.mxu0 0.0
      %1223 = vmatpush1.msra.mxu0 %v1211
      %1224 = vmatprep.subr.mxu0 0.0
      %1225 = vmatpush1.msra.mxu0 0.0
      %1226 = vmatprep.subr.mxu0 0.0
      %1227 = vmatpush1.msra.mxu0 0.0
      %1228 = vmatprep.subr.mxu0 0.0
      %1229 = vmatpush1.msra.mxu0 0.0
      %1230 = vmatprep.subr.mxu0 0.0
      %1231 = vmatpush1.msra.mxu0 0.0
      %1232 = vmatprep.subr.mxu0 0.0
      %1233 = vmatpush1.msra.mxu0 0.0
      %1234 = vmatprep.subr.mxu0 0.0
      %1235 = vmatpush1.msra.mxu0 0.0
      %1236 = vmatprep.subr.mxu0 0.0
      %1237 = vmatpush1.msra.mxu0 0.0
      %1238 = vmatprep.subr.mxu0 0.0
      %1239 = vmatpush1.msra.mxu0 0.0
      %1240 = vmatprep.subr.mxu0 0.0
      %1241 = vmatpush1.msra.mxu0 0.0
      %1242 = vmatprep.subr.mxu0 0.0
      %1243 = vmatpush1.msra.mxu0 0.0
      %1244 = vmatprep.subr.mxu0 0.0
      %1245 = vmatpush1.msra.mxu0 0.0
      %1246 = vmatprep.subr.mxu0 0.0
      %1247 = vmatpush1.msra.mxu0 0.0
      %1248 = vmatprep.subr.mxu0 0.0
      %1249 = vmatpush1.msra.mxu0 0.0
      %1250 = vmatprep.subr.mxu0 0.0
      %1251 = vmatpush1.msra.mxu0 0.0
      %1252 = vmatprep.subr.mxu0 0.0
      %1253 = vmatpush1.msra.mxu0 0.0
      %1254 = vmatprep.subr.mxu0 0.0
      %1255 = vmatpush1.msra.mxu0 0.0
      %1256 = vmatprep.subr.mxu0 0.0
      %1257 = vmatpush1.msra.mxu0 0.0
      %1258 = vmatprep.subr.mxu0 0.0
      %1259 = vmatpush1.msra.mxu0 0.0
      %1260 = vmatprep.subr.mxu0 0.0
      %1261 = vmatpush1.msra.mxu0 0.0
      %1262 = vmatprep.subr.mxu0 0.0
      %1263 = vmatpush1.msra.mxu0 0.0
      %1264 = vmatprep.subr.mxu0 0.0
      %1265 = vmatpush1.msra.mxu0 0.0
      %1266 = vmatprep.subr.mxu0 0.0
      %1267 = vmatpush1.msra.mxu0 0.0
      %1268 = vmatprep.subr.mxu0 0.0
      %1269 = vmatpush1.msra.mxu0 0.0
      %1270 = vmatprep.subr.mxu0 0.0
      %1271 = vmatpush1.msra.mxu0 0.0
      %1272 = vmatprep.subr.mxu0 0.0
      %1273 = vmatpush1.msra.mxu0 0.0
      %1274 = vmatprep.subr.mxu0 0.0
      %1275 = vmatpush1.msra.mxu0 0.0
      %1276 = vmatprep.subr.mxu0 0.0
      %1277 = vmatpush1.msra.mxu0 0.0
      %1278 = vmatprep.subr.mxu0 0.0
      %1279 = vmatpush1.msra.mxu0 0.0
      %1280 = vmatprep.mubr.f32.mxu0 0.0
      %1281 = vmatmul.mubr.f32.gmra.mrb[0].mxu0 %v1214
      %v1282 = vpop.f32.mrb[0].mxu0
      %v1283 = vadd.f32 %v1212, %v1282
      %v1284 = vpop.f32.mrb[0].mxu0
      %1285 = vdwg.mxu0
      %v1286 = vld [vmem:[#allocation14] sm:$0xff]
      %v1287 = vld [vmem:[#allocation14 + $0x8] sm:$0xff]
      %v1288 = vld [vmem:[#allocation14 + $0x10] sm:$0xff]
      %v1289 = vld [vmem:[#allocation14 + $0x18] sm:$0xff]
      %v1290 = vld [vmem:[%s13] sm:$0x1]
      %1292 = vrot.lane.b32.xlu0 %v1119, 96
      %v1293 = vpop.permute.xlu0 %1292
      %v1294 = vsel %vm143, %v1293, 0
      %1296 = vmatprep.subr.mxu0 0.0
      %1297 = vmatpush1.msra.mxu0 %v1286
      %1298 = vmatprep.subr.mxu0 0.0
      %1299 = vmatpush1.msra.mxu0 %v1287
      %1300 = vmatprep.subr.mxu0 0.0
      %1301 = vmatpush1.msra.mxu0 %v1288
      %1302 = vmatprep.subr.mxu0 0.0
      %1303 = vmatpush1.msra.mxu0 %v1289
      %1304 = vmatprep.subr.mxu0 0.0
      %1305 = vmatpush1.msra.mxu0 0.0
      %1306 = vmatprep.subr.mxu0 0.0
      %1307 = vmatpush1.msra.mxu0 0.0
      %1308 = vmatprep.subr.mxu0 0.0
      %1309 = vmatpush1.msra.mxu0 0.0
      %1310 = vmatprep.subr.mxu0 0.0
      %1311 = vmatpush1.msra.mxu0 0.0
      %1312 = vmatprep.subr.mxu0 0.0
      %1313 = vmatpush1.msra.mxu0 0.0
      %1314 = vmatprep.subr.mxu0 0.0
      %1315 = vmatpush1.msra.mxu0 0.0
      %1316 = vmatprep.subr.mxu0 0.0
      %1317 = vmatpush1.msra.mxu0 0.0
      %1318 = vmatprep.subr.mxu0 0.0
      %1319 = vmatpush1.msra.mxu0 0.0
      %1320 = vmatprep.subr.mxu0 0.0
      %1321 = vmatpush1.msra.mxu0 0.0
      %1322 = vmatprep.subr.mxu0 0.0
      %1323 = vmatpush1.msra.mxu0 0.0
      %1324 = vmatprep.subr.mxu0 0.0
      %1325 = vmatpush1.msra.mxu0 0.0
      %1326 = vmatprep.subr.mxu0 0.0
      %1327 = vmatpush1.msra.mxu0 0.0
      %1328 = vmatprep.subr.mxu0 0.0
      %1329 = vmatpush1.msra.mxu0 0.0
      %1330 = vmatprep.subr.mxu0 0.0
      %1331 = vmatpush1.msra.mxu0 0.0
      %1332 = vmatprep.subr.mxu0 0.0
      %1333 = vmatpush1.msra.mxu0 0.0
      %1334 = vmatprep.subr.mxu0 0.0
      %1335 = vmatpush1.msra.mxu0 0.0
      %1336 = vmatprep.subr.mxu0 0.0
      %1337 = vmatpush1.msra.mxu0 0.0
      %1338 = vmatprep.subr.mxu0 0.0
      %1339 = vmatpush1.msra.mxu0 0.0
      %1340 = vmatprep.subr.mxu0 0.0
      %1341 = vmatpush1.msra.mxu0 0.0
      %1342 = vmatprep.subr.mxu0 0.0
      %1343 = vmatpush1.msra.mxu0 0.0
      %1344 = vmatprep.subr.mxu0 0.0
      %1345 = vmatpush1.msra.mxu0 0.0
      %1346 = vmatprep.subr.mxu0 0.0
      %1347 = vmatpush1.msra.mxu0 0.0
      %1348 = vmatprep.subr.mxu0 0.0
      %1349 = vmatpush1.msra.mxu0 0.0
      %1350 = vmatprep.subr.mxu0 0.0
      %1351 = vmatpush1.msra.mxu0 0.0
      %1352 = vmatprep.subr.mxu0 0.0
      %1353 = vmatpush1.msra.mxu0 0.0
      %1354 = vmatprep.subr.mxu0 0.0
      %1355 = vmatpush1.msra.mxu0 0.0
      %1356 = vmatprep.subr.mxu0 0.0
      %1357 = vmatpush1.msra.mxu0 0.0
      %1358 = vmatprep.subr.mxu0 0.0
      %1359 = vmatpush1.msra.mxu0 0.0
      %1360 = vmatprep.mubr.f32.mxu0 0.0
      %1361 = vmatmul.mubr.f32.gmra.mrb[0].mxu0 %v1294
      %v1362 = vpop.f32.mrb[0].mxu0
      %v1363 = vadd.f32 %v1290, %v1362
      %v1364 = vpop.f32.mrb[0].mxu0
      %1365 = vdwg.mxu0
      %v1366 = vadd.f32 %v1283, %v1363
      %v1367 = vxor.u32 %v1366, 2147483648
      %v1368 = vmul.f32 %v1367, 1.442695
      %v1369 = vpow.pop %v1368
      %v1370 = vadd.f32 %v1369, 1.0
      %v1371 = vrcp.pop %v1370
      %v1372 = vmul.f32 1.0, %v1371
      %1374 = vrot.lane.b32.xlu0 %v1363, 64
      %v1375 = vpop.permute.xlu0 %1374
      %v1377 = vmul.f32 %v1372, %v1375
      %1379 = vrot.lane.b32.xlu0 %v1377, 64
      %v1380 = vpop.permute.xlu0 %1379
      %v1382 = vadd.f32 %v1283, %v1380
      %v1383 = vtanh.pop %v1382
      %v1384 = vsub.f32 1.0, %v1372
      %1386 = vrot.lane.b32.xlu0 %v1383, 96
      %v1387 = vpop.permute.xlu0 %1386
      %v1389 = vmul.f32 %v1384, %v1387
      %v1390 = vmul.f32 %v1372, %v1119
      %v1391 = vadd.f32 %v1389, %v1390
      %s1392 = scalar_lea.vmem [#allocation13], 32
      %v1393 = vld [vmem:[%s1392] sm:$0xff]
      %v1394 = vld [vmem:[%s1392 + $0x8] sm:$0xff]
      %v1395 = vld [vmem:[%s1392 + $0x10] sm:$0xff]
      %v1396 = vld [vmem:[%s1392 + $0x18] sm:$0xff]
      %s1397 = scalar_lea.vmem %s12, 1
      %v1398 = vld [vmem:[%s1397] sm:$0x1]
      %1400 = vrot.lane.b32.xlu0 %v1391, 96
      %v1401 = vpop.permute.xlu0 %1400
      %v1402 = vsel %vm143, %v1401, 0
      %1404 = vmatprep.subr.mxu0 0.0
      %1405 = vmatpush1.msra.mxu0 %v1393
      %1406 = vmatprep.subr.mxu0 0.0
      %1407 = vmatpush1.msra.mxu0 %v1394
      %1408 = vmatprep.subr.mxu0 0.0
      %1409 = vmatpush1.msra.mxu0 %v1395
      %1410 = vmatprep.subr.mxu0 0.0
      %1411 = vmatpush1.msra.mxu0 %v1396
      %1412 = vmatprep.subr.mxu0 0.0
      %1413 = vmatpush1.msra.mxu0 0.0
      %1414 = vmatprep.subr.mxu0 0.0
      %1415 = vmatpush1.msra.mxu0 0.0
      %1416 = vmatprep.subr.mxu0 0.0
      %1417 = vmatpush1.msra.mxu0 0.0
      %1418 = vmatprep.subr.mxu0 0.0
      %1419 = vmatpush1.msra.mxu0 0.0
      %1420 = vmatprep.subr.mxu0 0.0
      %1421 = vmatpush1.msra.mxu0 0.0
      %1422 = vmatprep.subr.mxu0 0.0
      %1423 = vmatpush1.msra.mxu0 0.0
      %1424 = vmatprep.subr.mxu0 0.0
      %1425 = vmatpush1.msra.mxu0 0.0
      %1426 = vmatprep.subr.mxu0 0.0
      %1427 = vmatpush1.msra.mxu0 0.0
      %1428 = vmatprep.subr.mxu0 0.0
      %1429 = vmatpush1.msra.mxu0 0.0
      %1430 = vmatprep.subr.mxu0 0.0
      %1431 = vmatpush1.msra.mxu0 0.0
      %1432 = vmatprep.subr.mxu0 0.0
      %1433 = vmatpush1.msra.mxu0 0.0
      %1434 = vmatprep.subr.mxu0 0.0
      %1435 = vmatpush1.msra.mxu0 0.0
      %1436 = vmatprep.subr.mxu0 0.0
      %1437 = vmatpush1.msra.mxu0 0.0
      %1438 = vmatprep.subr.mxu0 0.0
      %1439 = vmatpush1.msra.mxu0 0.0
      %1440 = vmatprep.subr.mxu0 0.0
      %1441 = vmatpush1.msra.mxu0 0.0
      %1442 = vmatprep.subr.mxu0 0.0
      %1443 = vmatpush1.msra.mxu0 0.0
      %1444 = vmatprep.subr.mxu0 0.0
      %1445 = vmatpush1.msra.mxu0 0.0
      %1446 = vmatprep.subr.mxu0 0.0
      %1447 = vmatpush1.msra.mxu0 0.0
      %1448 = vmatprep.subr.mxu0 0.0
      %1449 = vmatpush1.msra.mxu0 0.0
      %1450 = vmatprep.subr.mxu0 0.0
      %1451 = vmatpush1.msra.mxu0 0.0
      %1452 = vmatprep.subr.mxu0 0.0
      %1453 = vmatpush1.msra.mxu0 0.0
      %1454 = vmatprep.subr.mxu0 0.0
      %1455 = vmatpush1.msra.mxu0 0.0
      %1456 = vmatprep.subr.mxu0 0.0
      %1457 = vmatpush1.msra.mxu0 0.0
      %1458 = vmatprep.subr.mxu0 0.0
      %1459 = vmatpush1.msra.mxu0 0.0
      %1460 = vmatprep.subr.mxu0 0.0
      %1461 = vmatpush1.msra.mxu0 0.0
      %1462 = vmatprep.subr.mxu0 0.0
      %1463 = vmatpush1.msra.mxu0 0.0
      %1464 = vmatprep.subr.mxu0 0.0
      %1465 = vmatpush1.msra.mxu0 0.0
      %1466 = vmatprep.subr.mxu0 0.0
      %1467 = vmatpush1.msra.mxu0 0.0
      %1468 = vmatprep.mubr.f32.mxu0 0.0
      %1469 = vmatmul.mubr.f32.gmra.mrb[0].mxu0 %v1402
      %v1470 = vpop.f32.mrb[0].mxu0
      %v1471 = vadd.f32 %v1398, %v1470
      %v1472 = vpop.f32.mrb[0].mxu0
      %1473 = vdwg.mxu0
      %s1474 = scalar_lea.vmem [#allocation14], 32
      %v1475 = vld [vmem:[%s1474] sm:$0xff]
      %v1476 = vld [vmem:[%s1474 + $0x8] sm:$0xff]
      %v1477 = vld [vmem:[%s1474 + $0x10] sm:$0xff]
      %v1478 = vld [vmem:[%s1474 + $0x18] sm:$0xff]
      %s1479 = scalar_lea.vmem %s13, 1
      %v1480 = vld [vmem:[%s1479] sm:$0x1]
      %1482 = vrot.lane.b32.xlu0 %v1120, 96
      %v1483 = vpop.permute.xlu0 %1482
      %v1484 = vsel %vm143, %v1483, 0
      %1486 = vmatprep.subr.mxu0 0.0
      %1487 = vmatpush1.msra.mxu0 %v1475
      %1488 = vmatprep.subr.mxu0 0.0
      %1489 = vmatpush1.msra.mxu0 %v1476
      %1490 = vmatprep.subr.mxu0 0.0
      %1491 = vmatpush1.msra.mxu0 %v1477
      %1492 = vmatprep.subr.mxu0 0.0
      %1493 = vmatpush1.msra.mxu0 %v1478
      %1494 = vmatprep.subr.mxu0 0.0
      %1495 = vmatpush1.msra.mxu0 0.0
      %1496 = vmatprep.subr.mxu0 0.0
      %1497 = vmatpush1.msra.mxu0 0.0
      %1498 = vmatprep.subr.mxu0 0.0
      %1499 = vmatpush1.msra.mxu0 0.0
      %1500 = vmatprep.subr.mxu0 0.0
      %1501 = vmatpush1.msra.mxu0 0.0
      %1502 = vmatprep.subr.mxu0 0.0
      %1503 = vmatpush1.msra.mxu0 0.0
      %1504 = vmatprep.subr.mxu0 0.0
      %1505 = vmatpush1.msra.mxu0 0.0
      %1506 = vmatprep.subr.mxu0 0.0
      %1507 = vmatpush1.msra.mxu0 0.0
      %1508 = vmatprep.subr.mxu0 0.0
      %1509 = vmatpush1.msra.mxu0 0.0
      %1510 = vmatprep.subr.mxu0 0.0
      %1511 = vmatpush1.msra.mxu0 0.0
      %1512 = vmatprep.subr.mxu0 0.0
      %1513 = vmatpush1.msra.mxu0 0.0
      %1514 = vmatprep.subr.mxu0 0.0
      %1515 = vmatpush1.msra.mxu0 0.0
      %1516 = vmatprep.subr.mxu0 0.0
      %1517 = vmatpush1.msra.mxu0 0.0
      %1518 = vmatprep.subr.mxu0 0.0
      %1519 = vmatpush1.msra.mxu0 0.0
      %1520 = vmatprep.subr.mxu0 0.0
      %1521 = vmatpush1.msra.mxu0 0.0
      %1522 = vmatprep.subr.mxu0 0.0
      %1523 = vmatpush1.msra.mxu0 0.0
      %1524 = vmatprep.subr.mxu0 0.0
      %1525 = vmatpush1.msra.mxu0 0.0
      %1526 = vmatprep.subr.mxu0 0.0
      %1527 = vmatpush1.msra.mxu0 0.0
      %1528 = vmatprep.subr.mxu0 0.0
      %1529 = vmatpush1.msra.mxu0 0.0
      %1530 = vmatprep.subr.mxu0 0.0
      %1531 = vmatpush1.msra.mxu0 0.0
      %1532 = vmatprep.subr.mxu0 0.0
      %1533 = vmatpush1.msra.mxu0 0.0
      %1534 = vmatprep.subr.mxu0 0.0
      %1535 = vmatpush1.msra.mxu0 0.0
      %1536 = vmatprep.subr.mxu0 0.0
      %1537 = vmatpush1.msra.mxu0 0.0
      %1538 = vmatprep.subr.mxu0 0.0
      %1539 = vmatpush1.msra.mxu0 0.0
      %1540 = vmatprep.subr.mxu0 0.0
      %1541 = vmatpush1.msra.mxu0 0.0
      %1542 = vmatprep.subr.mxu0 0.0
      %1543 = vmatpush1.msra.mxu0 0.0
      %1544 = vmatprep.subr.mxu0 0.0
      %1545 = vmatpush1.msra.mxu0 0.0
      %1546 = vmatprep.subr.mxu0 0.0
      %1547 = vmatpush1.msra.mxu0 0.0
      %1548 = vmatprep.subr.mxu0 0.0
      %1549 = vmatpush1.msra.mxu0 0.0
      %1550 = vmatprep.mubr.f32.mxu0 0.0
      %1551 = vmatmul.mubr.f32.gmra.mrb[0].mxu0 %v1484
      %v1552 = vpop.f32.mrb[0].mxu0
      %v1553 = vadd.f32 %v1480, %v1552
      %v1554 = vpop.f32.mrb[0].mxu0
      %1555 = vdwg.mxu0
      %v1556 = vadd.f32 %v1471, %v1553
      %v1557 = vxor.u32 %v1556, 2147483648
      %v1558 = vmul.f32 %v1557, 1.442695
      %v1559 = vpow.pop %v1558
      %v1560 = vadd.f32 %v1559, 1.0
      %v1561 = vrcp.pop %v1560
      %v1562 = vmul.f32 1.0, %v1561
      %1564 = vrot.lane.b32.xlu0 %v1553, 64
      %v1565 = vpop.permute.xlu0 %1564
      %v1567 = vmul.f32 %v1562, %v1565
      %1569 = vrot.lane.b32.xlu0 %v1567, 64
      %v1570 = vpop.permute.xlu0 %1569
      %v1572 = vadd.f32 %v1471, %v1570
      %v1573 = vtanh.pop %v1572
      %v1574 = vsub.f32 1.0, %v1562
      %1576 = vrot.lane.b32.xlu0 %v1573, 96
      %v1577 = vpop.permute.xlu0 %1576
      %v1579 = vmul.f32 %v1574, %v1577
      %v1580 = vmul.f32 %v1562, %v1120
      %v1581 = vadd.f32 %v1579, %v1580
      %1583 = vrot.lane.b32.xlu0 %v1581, 96
      %v1584 = vpop.permute.xlu0 %1583
      %v1585 = vsel %vm143, %v1584, 0
      %v1588 = vsel %vm143, %v1109, 0
      %1590 = vmatprep.subr.mxu0 0.0
      %1591 = vmatpush1.xpose.msra.mxu0 %v1588
      %1592 = vmatprep.subr.mxu0 0.0
      %1593 = vmatpush1.xpose.msra.mxu0 0.0
      %1594 = vmatprep.subr.mxu0 0.0
      %1595 = vmatpush1.xpose.msra.mxu0 0.0
      %1596 = vmatprep.subr.mxu0 0.0
      %1597 = vmatpush1.xpose.msra.mxu0 0.0
      %1598 = vmatprep.subr.mxu0 0.0
      %1599 = vmatpush1.xpose.msra.mxu0 0.0
      %1600 = vmatprep.subr.mxu0 0.0
      %1601 = vmatpush1.xpose.msra.mxu0 0.0
      %1602 = vmatprep.subr.mxu0 0.0
      %1603 = vmatpush1.xpose.msra.mxu0 0.0
      %1604 = vmatprep.subr.mxu0 0.0
      %1605 = vmatpush1.xpose.msra.mxu0 0.0
      %1606 = vmatprep.subr.mxu0 0.0
      %1607 = vmatpush1.xpose.msra.mxu0 0.0
      %1608 = vmatprep.subr.mxu0 0.0
      %1609 = vmatpush1.xpose.msra.mxu0 0.0
      %1610 = vmatprep.subr.mxu0 0.0
      %1611 = vmatpush1.xpose.msra.mxu0 0.0
      %1612 = vmatprep.subr.mxu0 0.0
      %1613 = vmatpush1.xpose.msra.mxu0 0.0
      %1614 = vmatprep.subr.mxu0 0.0
      %1615 = vmatpush1.xpose.msra.mxu0 0.0
      %1616 = vmatprep.subr.mxu0 0.0
      %1617 = vmatpush1.xpose.msra.mxu0 0.0
      %1618 = vmatprep.subr.mxu0 0.0
      %1619 = vmatpush1.xpose.msra.mxu0 0.0
      %1620 = vmatprep.subr.mxu0 0.0
      %1621 = vmatpush1.xpose.msra.mxu0 0.0
      %1622 = vmatprep.subr.mxu0 0.0
      %1623 = vmatpush1.xpose.msra.mxu0 0.0
      %1624 = vmatprep.subr.mxu0 0.0
      %1625 = vmatpush1.xpose.msra.mxu0 0.0
      %1626 = vmatprep.subr.mxu0 0.0
      %1627 = vmatpush1.xpose.msra.mxu0 0.0
      %1628 = vmatprep.subr.mxu0 0.0
      %1629 = vmatpush1.xpose.msra.mxu0 0.0
      %1630 = vmatprep.subr.mxu0 0.0
      %1631 = vmatpush1.xpose.msra.mxu0 0.0
      %1632 = vmatprep.subr.mxu0 0.0
      %1633 = vmatpush1.xpose.msra.mxu0 0.0
      %1634 = vmatprep.subr.mxu0 0.0
      %1635 = vmatpush1.xpose.msra.mxu0 0.0
      %1636 = vmatprep.subr.mxu0 0.0
      %1637 = vmatpush1.xpose.msra.mxu0 0.0
      %1638 = vmatprep.subr.mxu0 0.0
      %1639 = vmatpush1.xpose.msra.mxu0 0.0
      %1640 = vmatprep.subr.mxu0 0.0
      %1641 = vmatpush1.xpose.msra.mxu0 0.0
      %1642 = vmatprep.subr.mxu0 0.0
      %1643 = vmatpush1.xpose.msra.mxu0 0.0
      %1644 = vmatprep.subr.mxu0 0.0
      %1645 = vmatpush1.xpose.msra.mxu0 0.0
      %1646 = vmatprep.subr.mxu0 0.0
      %1647 = vmatpush1.xpose.msra.mxu0 0.0
      %1648 = vmatprep.subr.mxu0 0.0
      %1649 = vmatpush1.xpose.msra.mxu0 0.0
      %1650 = vmatprep.subr.mxu0 0.0
      %1651 = vmatpush1.xpose.msra.mxu0 0.0
      %1652 = vmatprep.subr.mxu0 0.0
      %1653 = vmatpush1.xpose.msra.mxu0 0.0
      %1654 = vmatprep.mubr.f32.mxu0 0.0
      %1655 = vmatmul.mubr.f32.gmra.mrb[0].mxu0 %v1585
      %v1656 = vpop.f32.mrb[0].mxu0
      %v1657 = vadd.f32 0.0, %v1656
      %v1658 = vpop.f32.mrb[0].mxu0
      %1659 = vdwg.mxu0
      %vm1660 = vcmask 57344
      %v1661 = vsel %vm1660, %v1657, -inf
      %1662 = vmax.xlane.f32.xlu0 %v1661
      %v1663 = vpop.xlane.xlu0 %1662
      %v1664 = vsub.f32 %v1657, %v1663
      %v1665 = vmul.f32 %v1664, 1.442695
      %v1666 = vpow.pop %v1665
      %v1667 = vsel %vm1660, %v1666, 0.0
      %1668 = vadd.xlane.f32.xlu0 %v1667
      %v1669 = vpop.xlane.xlu0 %1668
      %v1670 = vrcp.pop %v1669
      %v1671 = vmul.f32 %v1666, %v1670
      %vm1672 = vcmask 64512
      %v1674 = vsel %vm1672, %v1671, 0
      %1676 = vmatprep.subr.mxu0 0.0
      %1677 = vmatpush1.msra.mxu0 %v1109
      %1678 = vmatprep.subr.mxu0 0.0
      %1679 = vmatpush1.msra.mxu0 0.0
      %1680 = vmatprep.subr.mxu0 0.0
      %1681 = vmatpush1.msra.mxu0 0.0
      %1682 = vmatprep.subr.mxu0 0.0
      %1683 = vmatpush1.msra.mxu0 0.0
      %1684 = vmatprep.subr.mxu0 0.0
      %1685 = vmatpush1.msra.mxu0 0.0
      %1686 = vmatprep.subr.mxu0 0.0
      %1687 = vmatpush1.msra.mxu0 0.0
      %1688 = vmatprep.subr.mxu0 0.0
      %1689 = vmatpush1.msra.mxu0 0.0
      %1690 = vmatprep.subr.mxu0 0.0
      %1691 = vmatpush1.msra.mxu0 0.0
      %1692 = vmatprep.subr.mxu0 0.0
      %1693 = vmatpush1.msra.mxu0 0.0
      %1694 = vmatprep.subr.mxu0 0.0
      %1695 = vmatpush1.msra.mxu0 0.0
      %1696 = vmatprep.subr.mxu0 0.0
      %1697 = vmatpush1.msra.mxu0 0.0
      %1698 = vmatprep.subr.mxu0 0.0
      %1699 = vmatpush1.msra.mxu0 0.0
      %1700 = vmatprep.subr.mxu0 0.0
      %1701 = vmatpush1.msra.mxu0 0.0
      %1702 = vmatprep.subr.mxu0 0.0
      %1703 = vmatpush1.msra.mxu0 0.0
      %1704 = vmatprep.subr.mxu0 0.0
      %1705 = vmatpush1.msra.mxu0 0.0
      %1706 = vmatprep.subr.mxu0 0.0
      %1707 = vmatpush1.msra.mxu0 0.0
      %1708 = vmatprep.subr.mxu0 0.0
      %1709 = vmatpush1.msra.mxu0 0.0
      %1710 = vmatprep.subr.mxu0 0.0
      %1711 = vmatpush1.msra.mxu0 0.0
      %1712 = vmatprep.subr.mxu0 0.0
      %1713 = vmatpush1.msra.mxu0 0.0
      %1714 = vmatprep.subr.mxu0 0.0
      %1715 = vmatpush1.msra.mxu0 0.0
      %1716 = vmatprep.subr.mxu0 0.0
      %1717 = vmatpush1.msra.mxu0 0.0
      %1718 = vmatprep.subr.mxu0 0.0
      %1719 = vmatpush1.msra.mxu0 0.0
      %1720 = vmatprep.subr.mxu0 0.0
      %1721 = vmatpush1.msra.mxu0 0.0
      %1722 = vmatprep.subr.mxu0 0.0
      %1723 = vmatpush1.msra.mxu0 0.0
      %1724 = vmatprep.subr.mxu0 0.0
      %1725 = vmatpush1.msra.mxu0 0.0
      %1726 = vmatprep.subr.mxu0 0.0
      %1727 = vmatpush1.msra.mxu0 0.0
      %1728 = vmatprep.subr.mxu0 0.0
      %1729 = vmatpush1.msra.mxu0 0.0
      %1730 = vmatprep.subr.mxu0 0.0
      %1731 = vmatpush1.msra.mxu0 0.0
      %1732 = vmatprep.subr.mxu0 0.0
      %1733 = vmatpush1.msra.mxu0 0.0
      %1734 = vmatprep.subr.mxu0 0.0
      %1735 = vmatpush1.msra.mxu0 0.0
      %1736 = vmatprep.subr.mxu0 0.0
      %1737 = vmatpush1.msra.mxu0 0.0
      %1738 = vmatprep.subr.mxu0 0.0
      %1739 = vmatpush1.msra.mxu0 0.0
      %1740 = vmatprep.mubr.f32.mxu0 0.0
      %1741 = vmatmul.mubr.f32.gmra.mrb[0].mxu0 %v1674
      %v1742 = vpop.f32.mrb[0].mxu0
      %v1743 = vadd.f32 0.0, %v1742
      %v1744 = vpop.f32.mrb[0].mxu0
      %1745 = vdwg.mxu0
      %v1746 = vld [vmem:[#allocation16] sm:$0xff]
      %v1747 = vld [vmem:[#allocation16 + $0x8] sm:$0xff]
      %v1748 = vld [vmem:[#allocation16 + $0x10] sm:$0xff]
      %v1749 = vld [vmem:[#allocation16 + $0x18] sm:$0xff]
      %s1750 = scalar_lea.vmem [#allocation16], 32
      %v1751 = vld [vmem:[%s1750] sm:$0xff]
      %v1752 = vld [vmem:[%s1750 + $0x8] sm:$0xff]
      %v1753 = vld [vmem:[%s1750 + $0x10] sm:$0xff]
      %v1754 = vld [vmem:[%s1750 + $0x18] sm:$0xff]
      %v1756 = vsel %vm143, %v1743, 0
      %1758 = vmatprep.subr.mxu0 0.0
      %1759 = vmatpush1.msra.mxu0 %v1751
      %1760 = vmatprep.subr.mxu0 0.0
      %1761 = vmatpush1.msra.mxu0 %v1752
      %1762 = vmatprep.subr.mxu0 0.0
      %1763 = vmatpush1.msra.mxu0 %v1753
      %1764 = vmatprep.subr.mxu0 0.0
      %1765 = vmatpush1.msra.mxu0 %v1754
      %1766 = vmatprep.subr.mxu0 0.0
      %1767 = vmatpush1.msra.mxu0 0.0
      %1768 = vmatprep.subr.mxu0 0.0
      %1769 = vmatpush1.msra.mxu0 0.0
      %1770 = vmatprep.subr.mxu0 0.0
      %1771 = vmatpush1.msra.mxu0 0.0
      %1772 = vmatprep.subr.mxu0 0.0
      %1773 = vmatpush1.msra.mxu0 0.0
      %1774 = vmatprep.subr.mxu0 0.0
      %1775 = vmatpush1.msra.mxu0 0.0
      %1776 = vmatprep.subr.mxu0 0.0
      %1777 = vmatpush1.msra.mxu0 0.0
      %1778 = vmatprep.subr.mxu0 0.0
      %1779 = vmatpush1.msra.mxu0 0.0
      %1780 = vmatprep.subr.mxu0 0.0
      %1781 = vmatpush1.msra.mxu0 0.0
      %1782 = vmatprep.subr.mxu0 0.0
      %1783 = vmatpush1.msra.mxu0 0.0
      %1784 = vmatprep.subr.mxu0 0.0
      %1785 = vmatpush1.msra.mxu0 0.0
      %1786 = vmatprep.subr.mxu0 0.0
      %1787 = vmatpush1.msra.mxu0 0.0
      %1788 = vmatprep.subr.mxu0 0.0
      %1789 = vmatpush1.msra.mxu0 0.0
      %1790 = vmatprep.subr.mxu0 0.0
      %1791 = vmatpush1.msra.mxu0 0.0
      %1792 = vmatprep.subr.mxu0 0.0
      %1793 = vmatpush1.msra.mxu0 0.0
      %1794 = vmatprep.subr.mxu0 0.0
      %1795 = vmatpush1.msra.mxu0 0.0
      %1796 = vmatprep.subr.mxu0 0.0
      %1797 = vmatpush1.msra.mxu0 0.0
      %1798 = vmatprep.subr.mxu0 0.0
      %1799 = vmatpush1.msra.mxu0 0.0
      %1800 = vmatprep.subr.mxu0 0.0
      %1801 = vmatpush1.msra.mxu0 0.0
      %1802 = vmatprep.subr.mxu0 0.0
      %1803 = vmatpush1.msra.mxu0 0.0
      %1804 = vmatprep.subr.mxu0 0.0
      %1805 = vmatpush1.msra.mxu0 0.0
      %1806 = vmatprep.subr.mxu0 0.0
      %1807 = vmatpush1.msra.mxu0 0.0
      %1808 = vmatprep.subr.mxu0 0.0
      %1809 = vmatpush1.msra.mxu0 0.0
      %1810 = vmatprep.subr.mxu0 0.0
      %1811 = vmatpush1.msra.mxu0 0.0
      %1812 = vmatprep.subr.mxu0 0.0
      %1813 = vmatpush1.msra.mxu0 0.0
      %1814 = vmatprep.subr.mxu0 0.0
      %1815 = vmatpush1.msra.mxu0 0.0
      %1816 = vmatprep.subr.mxu0 0.0
      %1817 = vmatpush1.msra.mxu0 0.0
      %1818 = vmatprep.subr.mxu0 0.0
      %1819 = vmatpush1.msra.mxu0 0.0
      %1820 = vmatprep.subr.mxu0 0.0
      %1821 = vmatpush1.msra.mxu0 0.0
      %1822 = vmatprep.mubr.f32.mxu0 0.0
      %1823 = vmatmul.mubr.f32.gmra.mrb[0].mxu0 %v1756
      %v1824 = vpop.f32.mrb[0].mxu0
      %v1825 = vadd.f32 0.0, %v1824
      %v1826 = vpop.f32.mrb[0].mxu0
      %1827 = vdwg.mxu0
      %1828 = vmatprep.subr.mxu0 0.0
      %1829 = vmatpush1.msra.mxu0 %v1746
      %1830 = vmatprep.subr.mxu0 0.0
      %1831 = vmatpush1.msra.mxu0 %v1747
      %1832 = vmatprep.subr.mxu0 0.0
      %1833 = vmatpush1.msra.mxu0 %v1748
      %1834 = vmatprep.subr.mxu0 0.0
      %1835 = vmatpush1.msra.mxu0 %v1749
      %1836 = vmatprep.subr.mxu0 0.0
      %1837 = vmatpush1.msra.mxu0 0.0
      %1838 = vmatprep.subr.mxu0 0.0
      %1839 = vmatpush1.msra.mxu0 0.0
      %1840 = vmatprep.subr.mxu0 0.0
      %1841 = vmatpush1.msra.mxu0 0.0
      %1842 = vmatprep.subr.mxu0 0.0
      %1843 = vmatpush1.msra.mxu0 0.0
      %1844 = vmatprep.subr.mxu0 0.0
      %1845 = vmatpush1.msra.mxu0 0.0
      %1846 = vmatprep.subr.mxu0 0.0
      %1847 = vmatpush1.msra.mxu0 0.0
      %1848 = vmatprep.subr.mxu0 0.0
      %1849 = vmatpush1.msra.mxu0 0.0
      %1850 = vmatprep.subr.mxu0 0.0
      %1851 = vmatpush1.msra.mxu0 0.0
      %1852 = vmatprep.subr.mxu0 0.0
      %1853 = vmatpush1.msra.mxu0 0.0
      %1854 = vmatprep.subr.mxu0 0.0
      %1855 = vmatpush1.msra.mxu0 0.0
      %1856 = vmatprep.subr.mxu0 0.0
      %1857 = vmatpush1.msra.mxu0 0.0
      %1858 = vmatprep.subr.mxu0 0.0
      %1859 = vmatpush1.msra.mxu0 0.0
      %1860 = vmatprep.subr.mxu0 0.0
      %1861 = vmatpush1.msra.mxu0 0.0
      %1862 = vmatprep.subr.mxu0 0.0
      %1863 = vmatpush1.msra.mxu0 0.0
      %1864 = vmatprep.subr.mxu0 0.0
      %1865 = vmatpush1.msra.mxu0 0.0
      %1866 = vmatprep.subr.mxu0 0.0
      %1867 = vmatpush1.msra.mxu0 0.0
      %1868 = vmatprep.subr.mxu0 0.0
      %1869 = vmatpush1.msra.mxu0 0.0
      %1870 = vmatprep.subr.mxu0 0.0
      %1871 = vmatpush1.msra.mxu0 0.0
      %1872 = vmatprep.subr.mxu0 0.0
      %1873 = vmatpush1.msra.mxu0 0.0
      %1874 = vmatprep.subr.mxu0 0.0
      %1875 = vmatpush1.msra.mxu0 0.0
      %1876 = vmatprep.subr.mxu0 0.0
      %1877 = vmatpush1.msra.mxu0 0.0
      %1878 = vmatprep.subr.mxu0 0.0
      %1879 = vmatpush1.msra.mxu0 0.0
      %1880 = vmatprep.subr.mxu0 0.0
      %1881 = vmatpush1.msra.mxu0 0.0
      %1882 = vmatprep.subr.mxu0 0.0
      %1883 = vmatpush1.msra.mxu0 0.0
      %1884 = vmatprep.subr.mxu0 0.0
      %1885 = vmatpush1.msra.mxu0 0.0
      %1886 = vmatprep.subr.mxu0 0.0
      %1887 = vmatpush1.msra.mxu0 0.0
      %1888 = vmatprep.subr.mxu0 0.0
      %1889 = vmatpush1.msra.mxu0 0.0
      %1890 = vmatprep.subr.mxu0 0.0
      %1891 = vmatpush1.msra.mxu0 0.0
      %1892 = vmatprep.mubr.f32.mxu0 0.0
      %1893 = vmatmul.mubr.f32.gmra.mrb[0].mxu0 %v1585
      %v1894 = vpop.f32.mrb[0].mxu0
      %v1895 = vadd.f32 %v1825, %v1894
      %v1896 = vpop.f32.mrb[0].mxu0
      %1897 = vdwg.mxu0
      %v1898 = vld [vmem:[%s15] sm:$0x1]
      %v1899 = vadd.f32 %v1895, %v1898
      %v1900 = vtanh.pop %v1899
      %v1901 = vld [vmem:[%s16] sm:$0xff]
      %v1902 = vld [vmem:[%s16 + $0x8] sm:$0xff]
      %v1903 = vld [vmem:[%s16 + $0x10] sm:$0xff]
      %v1904 = vld [vmem:[%s16 + $0x18] sm:$0xff]
      %v1905 = vld [vmem:[%s17] sm:$0x1]
      %v1907 = vsel %vm143, %v1900, 0
      %1909 = vmatprep.subr.mxu0 0.0
      %1910 = vmatpush1.msra.mxu0 %v1901
      %1911 = vmatprep.subr.mxu0 0.0
      %1912 = vmatpush1.msra.mxu0 %v1902
      %1913 = vmatprep.subr.mxu0 0.0
      %1914 = vmatpush1.msra.mxu0 %v1903
      %1915 = vmatprep.subr.mxu0 0.0
      %1916 = vmatpush1.msra.mxu0 %v1904
      %1917 = vmatprep.subr.mxu0 0.0
      %1918 = vmatpush1.msra.mxu0 0.0
      %1919 = vmatprep.subr.mxu0 0.0
      %1920 = vmatpush1.msra.mxu0 0.0
      %1921 = vmatprep.subr.mxu0 0.0
      %1922 = vmatpush1.msra.mxu0 0.0
      %1923 = vmatprep.subr.mxu0 0.0
      %1924 = vmatpush1.msra.mxu0 0.0
      %1925 = vmatprep.subr.mxu0 0.0
      %1926 = vmatpush1.msra.mxu0 0.0
      %1927 = vmatprep.subr.mxu0 0.0
      %1928 = vmatpush1.msra.mxu0 0.0
      %1929 = vmatprep.subr.mxu0 0.0
      %1930 = vmatpush1.msra.mxu0 0.0
      %1931 = vmatprep.subr.mxu0 0.0
      %1932 = vmatpush1.msra.mxu0 0.0
      %1933 = vmatprep.subr.mxu0 0.0
      %1934 = vmatpush1.msra.mxu0 0.0
      %1935 = vmatprep.subr.mxu0 0.0
      %1936 = vmatpush1.msra.mxu0 0.0
      %1937 = vmatprep.subr.mxu0 0.0
      %1938 = vmatpush1.msra.mxu0 0.0
      %1939 = vmatprep.subr.mxu0 0.0
      %1940 = vmatpush1.msra.mxu0 0.0
      %1941 = vmatprep.subr.mxu0 0.0
      %1942 = vmatpush1.msra.mxu0 0.0
      %1943 = vmatprep.subr.mxu0 0.0
      %1944 = vmatpush1.msra.mxu0 0.0
      %1945 = vmatprep.subr.mxu0 0.0
      %1946 = vmatpush1.msra.mxu0 0.0
      %1947 = vmatprep.subr.mxu0 0.0
      %1948 = vmatpush1.msra.mxu0 0.0
      %1949 = vmatprep.subr.mxu0 0.0
      %1950 = vmatpush1.msra.mxu0 0.0
      %1951 = vmatprep.subr.mxu0 0.0
      %1952 = vmatpush1.msra.mxu0 0.0
      %1953 = vmatprep.subr.mxu0 0.0
      %1954 = vmatpush1.msra.mxu0 0.0
      %1955 = vmatprep.subr.mxu0 0.0
      %1956 = vmatpush1.msra.mxu0 0.0
      %1957 = vmatprep.subr.mxu0 0.0
      %1958 = vmatpush1.msra.mxu0 0.0
      %1959 = vmatprep.subr.mxu0 0.0
      %1960 = vmatpush1.msra.mxu0 0.0
      %1961 = vmatprep.subr.mxu0 0.0
      %1962 = vmatpush1.msra.mxu0 0.0
      %1963 = vmatprep.subr.mxu0 0.0
      %1964 = vmatpush1.msra.mxu0 0.0
      %1965 = vmatprep.subr.mxu0 0.0
      %1966 = vmatpush1.msra.mxu0 0.0
      %1967 = vmatprep.subr.mxu0 0.0
      %1968 = vmatpush1.msra.mxu0 0.0
      %1969 = vmatprep.subr.mxu0 0.0
      %1970 = vmatpush1.msra.mxu0 0.0
      %1971 = vmatprep.subr.mxu0 0.0
      %1972 = vmatpush1.msra.mxu0 0.0
      %1973 = vmatprep.mubr.f32.mxu0 0.0
      %1974 = vmatmul.mubr.f32.gmra.mrb[0].mxu0 %v1907
      %v1975 = vpop.f32.mrb[0].mxu0
      %v1976 = vadd.f32 %v1905, %v1975
      %v1977 = vpop.f32.mrb[0].mxu0
      %1978 = vdwg.mxu0
      %vm1979 = vcmask 516096
      %v1980 = vsel %vm1979, %v1976, -inf
      %1981 = vmax.xlane.f32.xlu0 %v1980
      %v1982 = vpop.xlane.xlu0 %1981
      %v1983 = vsub.f32 %v1976, %v1982
      %v1984 = vmul.f32 %v1983, 1.442695
      %v1985 = vpow.pop %v1984
      %v1986 = vsel %vm1979, %v1985, 0.0
      %1987 = vadd.xlane.f32.xlu0 %v1986
      %v1988 = vpop.xlane.xlu0 %1987
      %v1989 = vrcp.pop %v1988
      %vm1990 = vcmp.ge.f32.partialorder %v1976, %v1982
      %v1991 = vsel %vm1990, %v1111, 64
      %v1992 = vsel %vm1979, %v1991, 2147483647
      %v1993 = vand.u32 %v1992, 65535
      %v1994 = vshra.s32 %v1992, 16
      %v1995 = vcvt.s32.f32 %v1993
      %v1996 = vcvt.s32.f32 %v1994
      %1997 = vmin.xlane.f32.xlu0 %v1996
      %v1998 = vpop.xlane.xlu0 %1997
      %vm1999 = vcmp.eq.f32.partialorder %v1996, %v1998
      %v2000 = vsel %vm1999, %v1995, inf
      %2001 = vmin.xlane.f32.xlu0 %v2000
      %v2002 = vpop.xlane.xlu0 %2001
      %v2003 = vcvt.f32.s32 %v2002
      %v2004 = vcvt.f32.s32 %v1998
      %v2005 = vshll.u32 %v2004, 16
      %v2006 = vadd.s32 %v2005, %v2003
      %v2007 = vstv %s1113
      %vm2008 = vcmp.eq.s32.totalorder %v1111, %v2007
      %v2009 = vsel %vm2008, %v2006, %v1121
      %v2010 = vsel %vm2008, %v1989, %v1122
    $region112: #{_greedy_search_decode.1} parent=1 // loop_footer
      %s1117 = sadd.s32 1, %s1113
    $region113: #{_greedy_search_decode.1} parent=1 // loop_footer_branch
      %1112 = sbr.rel target = $region109
    $region114: #{_greedy_search_decode.1} parent=1 // loop_exit
      _
    %vm2011 = vcmask 40960
    %2012 = vst.msk [vmem:[#allocation17] sm:$0x1] %vm2011, %v1121
    %2013 = vst.msk [vmem:[#allocation18] sm:$0x1] %vm2011, %v1122
    // Predicated region
    $region115: #{_greedy_search_decode.1} parent=1 // pred_check
      _
    $region116: #{_greedy_search_decode.1} parent=1 // pred_check_branch
      %2015 = sbr.rel (0) target = $region118
    $region117: #{_greedy_search_decode.1} parent=1 // pred_region
      %s2017 = ssub.s32 16, 16
      %2018 = vsyncadd [#allocation10], %s2017
      %s2020 = sshll.u32 [#allocation17], 4
      %s2021 = int_to_ptr.vmem [resolvable:$true] %s2020
      %2023 = dma.vmem_to_hbm [thread:$0]  %s2021, 16, %s18, [#allocation10]
    $region118: #{_greedy_search_decode.1} parent=1 // pred_fallthru
      _
    // Predicated region
    $region119: #{_greedy_search_decode.1} parent=1 // pred_check
      _
    $region120: #{_greedy_search_decode.1} parent=1 // pred_check_branch
      %2025 = sbr.rel (0) target = $region122
    $region121: #{_greedy_search_decode.1} parent=1 // pred_region
      %s2027 = ssub.s32 16, 16
      %2028 = vsyncadd [#allocation19], %s2027
      %s2030 = sshll.u32 [#allocation18], 4
      %s2031 = int_to_ptr.vmem [resolvable:$true] %s2030
      %2033 = dma.vmem_to_hbm [thread:$0]  %s2031, 16, %s19, [#allocation19]
    $region122: #{_greedy_search_decode.1} parent=1 // pred_fallthru
      _
    // Predicated region
    $region123: #{_greedy_search_decode.1} parent=1 // pred_check
      _
    $region124: #{_greedy_search_decode.1} parent=1 // pred_check_branch
      %2035 = sbr.rel (0) target = $region126
    $region125: #{_greedy_search_decode.1} parent=1 // pred_region
      %2036 = dma.done [#allocation10], 16
    $region126: #{_greedy_search_decode.1} parent=1 // pred_fallthru
      _
    // Predicated region
    $region127: #{_greedy_search_decode.1} parent=1 // pred_check
      _
    $region128: #{_greedy_search_decode.1} parent=1 // pred_check_branch
      %2038 = sbr.rel (0) target = $region130
    $region129: #{_greedy_search_decode.1} parent=1 // pred_region
      %2039 = dma.done [#allocation19], 16
    $region130: #{_greedy_search_decode.1} parent=1 // pred_fallthru
      _
    %2040 = vsyncpa [#allocation9], 1
    %2041 = vsyncpa [#allocation12], 1
    %2042 = vsyncpa [#allocation15], 1
    %2043 = vsyncpa [#allocation10], 1
    %2044 = vsyncpa [#allocation19], 1

</llo_original>
